<compile_context>
chip_gen: v5e
topology: v5e:2x2
jax: 0.10.0
libtpu: 0.0.40
codegen_flags: <defaults>
</compile_context>

<pallas_src>
import functools

import jax
import jax.numpy as jnp
from jax import lax
from jax.experimental import pallas as pl
from jax.experimental.pallas import tpu as pltpu

N_EMBED = 384      # C (module constant)
HEAD_SIZE = 64     # head_size
BATCH = 2          # B
SEQ = 128          # T  (<= block_size=512; causal mask built in-kernel)


def fuse_head_weights(wk, wq, wv):
    """One-time parameter prep (cache the result like a module parameter).

    Fuses the three (C, H) projection weights into a lane-dense (C, 3H) bf16
    block, order k | q | v, with the 1/sqrt(C) attention scale folded into the
    q columns so the kernel never touches the scores with an extra multiply.
    """
    C = wk.shape[0]
    scale = C ** (-0.5)                       # matches the PyTorch module (C**-0.5)
    return jnp.concatenate([wk, wq * scale, wv], axis=1).astype(jnp.bfloat16)


def head_kernel(x_ref, wqkv_ref, o_ref, *, batch, seq):
    # x_ref: (B*T, C) f32 ; wqkv_ref: (C, 3H) bf16 ; o_ref: (B*T, H) f32
    B, T = batch, seq
    H = o_ref.shape[-1]

    # Fused QKV projection for BOTH batches in one MXU pass:
    # (256, 384) x (384, 192), bf16 inputs, f32 accumulation.
    x_bf = x_ref[...].astype(jnp.bfloat16)
    qkv = jnp.dot(x_bf, wqkv_ref[...], preferred_element_type=jnp.float32)

    # 1/sqrt(C) already folded into the q columns of the fused weight.
    k = qkv[:, 0 * H:1 * H].astype(jnp.bfloat16)
    q = qkv[:, 1 * H:2 * H].astype(jnp.bfloat16)
    v = qkv[:, 2 * H:3 * H].astype(jnp.bfloat16)
    # TODO(synk): these 64-lane column slices split a 128-lane vreg at lane 64;
    # once >=2 heads are fused (multi-head use) each slice becomes a full
    # 128-lane group and the output turns 128-lane dense as well.

    # Causal mask from narrow iotas (low vreg pressure), shared across batches.
    row = lax.broadcasted_iota(jnp.int32, (T, 1), 0)
    col = lax.broadcasted_iota(jnp.int32, (1, T), 1)
    causal = col <= row

    for b in range(B):                         # static unroll, B=2
        lo = b * T
        qb = q[lo:lo + T]                      # (T, H) bf16, sublane-aligned slice
        kb = k[lo:lo + T]
        vb = v[lo:lo + T]

        # q @ k^T without materializing k.T (contract both operands on H).
        s = lax.dot_general(qb, kb,
                            dimension_numbers=(((1,), (1,)), ((), ())),
                            preferred_element_type=jnp.float32)   # (T, T) f32

        # Large finite bias instead of -inf (diagonal keeps m finite, denom>=1).
        s = jnp.where(causal, s, -1e30)

        # Numerically-stable softmax, bf16 numerator (bf16 EUP path on v6e/v7x),
        # f32-accumulated denominator, normalization deferred past p@v.
        m = jnp.max(s, axis=-1, keepdims=True)
        p = jnp.exp((s - m).astype(jnp.bfloat16))                 # (T, T) bf16
        denom = jnp.sum(p, axis=-1, keepdims=True, dtype=jnp.float32)

        # TODO(synk): nn.Dropout(0.2) is identity in eval mode; training-mode
        # dropout would need pltpu.prng_seed / prng_random_bits.

        ob = jnp.dot(p, vb, preferred_element_type=jnp.float32)   # (T, H) f32
        ob = ob * pl.reciprocal(denom, approx=True)                # EUP fast path
        o_ref[lo:lo + T, :] = ob.astype(o_ref.dtype)


@jax.jit
def head_forward(x, wqkv_bf16):
    """x: (B, T, C) f32; wqkv_bf16: (C, 3H) bf16 (from fuse_head_weights)."""
    B, T, C = x.shape
    H3 = wqkv_bf16.shape[1]
    H = H3 // 3

    # Contiguity-preserving reshapes (free): present 2-D slabs to the kernel.
    x2 = x.reshape(B * T, C)

    flops = 2 * B * T * C * H3 + 2 * B * (2 * T * T * H)     # qkv proj + qk^T + pv
    transcendentals = B * T * T                              # one exp per score
    bytes_accessed = x2.size * 4 + wqkv_bf16.size * 2 + B * T * H * 4

    kernel = functools.partial(head_kernel, batch=B, seq=T)

    # TODO(synk): on dual-TC v7x, when this head is used inside multi-head
    # attention, grid over head-groups with dimension_semantics=("parallel",)
    # so both TensorCores get substantial work; a single head at this size is
    # overhead-bound either way.
    out2 = pl.pallas_call(
        kernel,
        out_shape=jax.ShapeDtypeStruct((B * T, H), jnp.float32),
        grid_spec=pltpu.PrefetchScalarGridSpec(
            num_scalar_prefetch=0,
            grid=(1,),                                        # single step: both batches
            in_specs=[
                pl.BlockSpec((B * T, C), lambda i: (0, 0)),   # x slab (resident)
                pl.BlockSpec((C, H3), lambda i: (0, 0)),      # fused bf16 Wqkv
            ],
            out_specs=pl.BlockSpec((B * T, H), lambda i: (0, 0)),
        ),
        compiler_params=pltpu.CompilerParams(
            dimension_semantics=("arbitrary",)),
        cost_estimate=pl.CostEstimate(flops=flops,
                                      transcendentals=transcendentals,
                                      bytes_accessed=bytes_accessed),
    )(x2, wqkv_bf16)

    return out2.reshape(B, T, H)


def reference_forward(x, wk, wq, wv):
    """Pure-JAX f32 reference matching the PyTorch forward (eval mode)."""
    B, T, C = x.shape
    k = x @ wk
    q = x @ wq
    v = x @ wv
    wei = (q @ jnp.swapaxes(k, -2, -1)) * (C ** -0.5)
    mask = jnp.tril(jnp.ones((T, T), dtype=bool))
    wei = jnp.where(mask, wei, -jnp.inf)
    wei = jax.nn.softmax(wei, axis=-1)
    return wei @ v


if __name__ == "__main__":
    key = jax.random.PRNGKey(0)
    kx, kk, kq, kv = jax.random.split(key, 4)

    x = jax.random.normal(kx, (BATCH, SEQ, N_EMBED), dtype=jnp.float32)

    # Deterministic parameter init: uniform(-1/sqrt(C), 1/sqrt(C)) like nn.Linear,
    # stored pre-transposed as (C, H).
    bound = 1.0 / (N_EMBED ** 0.5)
    wk = jax.random.uniform(kk, (N_EMBED, HEAD_SIZE), jnp.float32, -bound, bound)
    wq = jax.random.uniform(kq, (N_EMBED, HEAD_SIZE), jnp.float32, -bound, bound)
    wv = jax.random.uniform(kv, (N_EMBED, HEAD_SIZE), jnp.float32, -bound, bound)

    # One-time fused/prescaled bf16 weight (cached as a parameter).
    wqkv = jax.block_until_ready(fuse_head_weights(wk, wq, wv))

    out = head_forward(x, wqkv)
    out = jax.block_until_ready(out)

    ref = reference_forward(x, wk, wq, wv)
    assert out.shape == (BATCH, SEQ, HEAD_SIZE)
    # Tolerance relaxed for bf16 MXU inputs / bf16 exp + approx reciprocal
    # (all matmuls accumulate in f32).
    assert jnp.allclose(out, ref, atol=5e-2, rtol=5e-2), \
        f"max abs err {jnp.max(jnp.abs(out - ref))}"

    print("KERNEL_OK")
</pallas_src>

<mosaic_0001>
module attributes {stable_mosaic.version = 11 : i64} {
  func.func @head_kernel(%arg0: i32, %arg1: memref<256x384xf32, #tpu.memory_space<vmem>>, %arg2: memref<384x192xbf16, #tpu.memory_space<vmem>>, %arg3: memref<256x64xf32, #tpu.memory_space<vmem>>) attributes {dimension_semantics = [#tpu.dimension_semantics<arbitrary>], iteration_bounds = array<i64: 1>, scalar_prefetch = 0 : i64, scratch_operands = 0 : i64, tpu.core_type = #tpu.core_type<tc>, window_params = [{pipeline_mode = #tpu.pipeline_mode<synchronous>, transform_indices = @transform_0, window_bounds = array<i64: 256, 384>}, {pipeline_mode = #tpu.pipeline_mode<synchronous>, transform_indices = @transform_1, window_bounds = array<i64: 384, 192>}, {pipeline_mode = #tpu.pipeline_mode<synchronous>, transform_indices = @transform_2, window_bounds = array<i64: 256, 64>}]} {
    %c0 = arith.constant 0 : index
    %c0_0 = arith.constant 0 : index
    %0 = vector.load %arg1[%c0, %c0_0] : memref<256x384xf32, #tpu.memory_space<vmem>>, vector<256x384xf32>
    %1 = arith.truncf %0 : vector<256x384xf32> to vector<256x384xbf16>
    %c0_1 = arith.constant 0 : index
    %c0_2 = arith.constant 0 : index
    %2 = vector.load %arg2[%c0_1, %c0_2] : memref<384x192xbf16, #tpu.memory_space<vmem>>, vector<384x192xbf16>
    %cst = arith.constant dense<0.000000e+00> : vector<256x192xf32>
    %3 = tpu.matmul %1, %2, %cst {dimension_numbers = #tpu.dot_dimension_numbers<[1], [0], [0], [1], [0, 0, 1, 1], [], []>} : vector<256x384xbf16>, vector<384x192xbf16>, vector<256x192xf32> -> vector<256x192xf32>
    %4 = vector.extract_strided_slice %3 {offsets = [0, 0], sizes = [256, 64], strides = [1, 1]} : vector<256x192xf32> to vector<256x64xf32>
    %5 = arith.truncf %4 : vector<256x64xf32> to vector<256x64xbf16>
    %6 = vector.extract_strided_slice %3 {offsets = [0, 64], sizes = [256, 64], strides = [1, 1]} : vector<256x192xf32> to vector<256x64xf32>
    %7 = arith.truncf %6 : vector<256x64xf32> to vector<256x64xbf16>
    %8 = vector.extract_strided_slice %3 {offsets = [0, 128], sizes = [256, 64], strides = [1, 1]} : vector<256x192xf32> to vector<256x64xf32>
    %9 = arith.truncf %8 : vector<256x64xf32> to vector<256x64xbf16>
    %10 = tpu.iota {dimensions = array<i32: 0>} : vector<128x1xi32>
    %11 = tpu.iota {dimensions = array<i32: 1>} : vector<1x128xi32>
    %12 = vector.broadcast %11 : vector<1x128xi32> to vector<128x128xi32>
    %13 = vector.broadcast %10 : vector<128x1xi32> to vector<128x128xi32>
    %14 = arith.cmpi sle, %12, %13 : vector<128x128xi32>
    %15 = vector.extract_strided_slice %7 {offsets = [0, 0], sizes = [128, 64], strides = [1, 1]} : vector<256x64xbf16> to vector<128x64xbf16>
    %16 = vector.extract_strided_slice %5 {offsets = [0, 0], sizes = [128, 64], strides = [1, 1]} : vector<256x64xbf16> to vector<128x64xbf16>
    %17 = vector.extract_strided_slice %9 {offsets = [0, 0], sizes = [128, 64], strides = [1, 1]} : vector<256x64xbf16> to vector<128x64xbf16>
    %cst_3 = arith.constant dense<0.000000e+00> : vector<128x128xf32>
    %18 = tpu.matmul %15, %16, %cst_3 {dimension_numbers = #tpu.dot_dimension_numbers<[1], [1], [0], [0], [0, 0, 1, 0], [], []>} : vector<128x64xbf16>, vector<128x64xbf16>, vector<128x128xf32> -> vector<128x128xf32>
    %cst_4 = arith.constant -1.000000e+30 : f32
    %19 = vector.broadcast %cst_4 : f32 to vector<128x128xf32>
    %20 = arith.select %14, %18, %19 : vector<128x128xi1>, vector<128x128xf32>
    %cst_5 = arith.constant dense<0xFF800000> : vector<128xf32>
    %21 = vector.multi_reduction <maximumf>, %20, %cst_5 [1] : vector<128x128xf32> to vector<128xf32>
    %22 = vector.shape_cast %21 : vector<128xf32> to vector<128x1xf32>
    %23 = vector.broadcast %22 : vector<128x1xf32> to vector<128x128xf32>
    %24 = arith.subf %20, %23 : vector<128x128xf32>
    %25 = arith.truncf %24 : vector<128x128xf32> to vector<128x128xbf16>
    %26 = math.exp %25 : vector<128x128xbf16>
    %27 = arith.extf %26 : vector<128x128xbf16> to vector<128x128xf32>
    %cst_6 = arith.constant dense<0.000000e+00> : vector<128xf32>
    %28 = vector.multi_reduction <add>, %27, %cst_6 [1] : vector<128x128xf32> to vector<128xf32>
    %29 = vector.shape_cast %28 : vector<128xf32> to vector<128x1xf32>
    %cst_7 = arith.constant dense<0.000000e+00> : vector<128x64xf32>
    %30 = tpu.matmul %26, %17, %cst_7 {dimension_numbers = #tpu.dot_dimension_numbers<[1], [0], [0], [1], [0, 0, 1, 1], [], []>} : vector<128x128xbf16>, vector<128x64xbf16>, vector<128x64xf32> -> vector<128x64xf32>
    %31 = tpu.reciprocal %29 {approx = true} : vector<128x1xf32> -> vector<128x1xf32>
    %32 = vector.broadcast %31 : vector<128x1xf32> to vector<128x64xf32>
    %33 = arith.mulf %30, %32 : vector<128x64xf32>
    %c0_8 = arith.constant 0 : index
    %c0_9 = arith.constant 0 : index
    %34 = vector.load %arg3[%c0_8, %c0_9] : memref<256x64xf32, #tpu.memory_space<vmem>>, vector<128x64xf32>
    tpu.vector_store %arg3[%c0_8, %c0_9], %33 {strides = array<i32>} : memref<256x64xf32, #tpu.memory_space<vmem>>, vector<128x64xf32>,
    %35 = vector.extract_strided_slice %7 {offsets = [128, 0], sizes = [128, 64], strides = [1, 1]} : vector<256x64xbf16> to vector<128x64xbf16>
    %36 = vector.extract_strided_slice %5 {offsets = [128, 0], sizes = [128, 64], strides = [1, 1]} : vector<256x64xbf16> to vector<128x64xbf16>
    %37 = vector.extract_strided_slice %9 {offsets = [128, 0], sizes = [128, 64], strides = [1, 1]} : vector<256x64xbf16> to vector<128x64xbf16>
    %cst_10 = arith.constant dense<0.000000e+00> : vector<128x128xf32>
    %38 = tpu.matmul %35, %36, %cst_10 {dimension_numbers = #tpu.dot_dimension_numbers<[1], [1], [0], [0], [0, 0, 1, 0], [], []>} : vector<128x64xbf16>, vector<128x64xbf16>, vector<128x128xf32> -> vector<128x128xf32>
    %cst_11 = arith.constant -1.000000e+30 : f32
    %39 = vector.broadcast %cst_11 : f32 to vector<128x128xf32>
    %40 = arith.select %14, %38, %39 : vector<128x128xi1>, vector<128x128xf32>
    %cst_12 = arith.constant dense<0xFF800000> : vector<128xf32>
    %41 = vector.multi_reduction <maximumf>, %40, %cst_12 [1] : vector<128x128xf32> to vector<128xf32>
    %42 = vector.shape_cast %41 : vector<128xf32> to vector<128x1xf32>
    %43 = vector.broadcast %42 : vector<128x1xf32> to vector<128x128xf32>
    %44 = arith.subf %40, %43 : vector<128x128xf32>
    %45 = arith.truncf %44 : vector<128x128xf32> to vector<128x128xbf16>
    %46 = math.exp %45 : vector<128x128xbf16>
    %47 = arith.extf %46 : vector<128x128xbf16> to vector<128x128xf32>
    %cst_13 = arith.constant dense<0.000000e+00> : vector<128xf32>
    %48 = vector.multi_reduction <add>, %47, %cst_13 [1] : vector<128x128xf32> to vector<128xf32>
    %49 = vector.shape_cast %48 : vector<128xf32> to vector<128x1xf32>
    %cst_14 = arith.constant dense<0.000000e+00> : vector<128x64xf32>
    %50 = tpu.matmul %46, %37, %cst_14 {dimension_numbers = #tpu.dot_dimension_numbers<[1], [0], [0], [1], [0, 0, 1, 1], [], []>} : vector<128x128xbf16>, vector<128x64xbf16>, vector<128x64xf32> -> vector<128x64xf32>
    %51 = tpu.reciprocal %49 {approx = true} : vector<128x1xf32> -> vector<128x1xf32>
    %52 = vector.broadcast %51 : vector<128x1xf32> to vector<128x64xf32>
    %53 = arith.mulf %50, %52 : vector<128x64xf32>
    %c128 = arith.constant 128 : index
    %c0_15 = arith.constant 0 : index
    %54 = vector.load %arg3[%c128, %c0_15] : memref<256x64xf32, #tpu.memory_space<vmem>>, vector<128x64xf32>
    tpu.vector_store %arg3[%c128, %c0_15], %53 {strides = array<i32>} : memref<256x64xf32, #tpu.memory_space<vmem>>, vector<128x64xf32>,
    return
  }
  func.func @transform_0(%arg0: i32) -> (i32, i32) {
    %c0_i32 = arith.constant 0 : i32
    %c0_i32_0 = arith.constant 0 : i32
    %c0_i32_1 = arith.constant 0 : i32
    return %c0_i32, %c0_i32_0 : i32, i32
  }
  func.func @transform_1(%arg0: i32) -> (i32, i32) {
    %c0_i32 = arith.constant 0 : i32
    %c0_i32_0 = arith.constant 0 : i32
    %c0_i32_1 = arith.constant 0 : i32
    return %c0_i32, %c0_i32_0 : i32, i32
  }
  func.func @transform_2(%arg0: i32) -> (i32, i32) {
    %c0_i32 = arith.constant 0 : i32
    %c0_i32_0 = arith.constant 0 : i32
    %c0_i32_1 = arith.constant 0 : i32
    return %c0_i32, %c0_i32_0 : i32, i32
  }
}

</mosaic_0001>

<llo_original>
// kernel: head_forward.1
$region0: #{head_forward.1}
  #allocation0 [shape = 'u32[]', space=smem, size = 0x4, offset = 0x4, fixed_abs, tag = 'smem constant byte address 0x4 - core index']
  #allocation1 [shape = 'u32[72,128]{1,0:T(1,128)}', space=vmem, size = 0x9000, scoped, tag = 'internal scratch']
  %s0 = inlined_call_operand.hbm [shape: f32[256,384], index: 0, kind: input, shape index: {}]
  %s1 = inlined_call_operand.vmem [shape: bf16[384,192], index: 1, kind: input, shape index: {}]
  %s2 = inlined_call_operand.vmem [shape: f32[256,64], index: 2, kind: output, shape index: {}]
  %s3 = sld [smem:[#allocation0]]
  $region22: #{head_forward.1} parent=0
    _
  %s5 = ssub.s32 1, %s3
  %s6 = scalar_select 0, %s5, %s3
  $region1: #{head_forward.1} parent=0
    #allocation2 [shape = 'u8[393216]{0}', space=vmem, size = 0x60000, scoped, tag = 'input window, operand 0, single buffered']
    #allocation3 [shape = 's32[1]{0}', space=sflag, size = 0x4, scoped, tag = 'scoped memory for head_forward.1']
    %7 = vsyncpa [#allocation3], 0
    // Predicated region
    $region2: #{head_forward.1} parent=1 // pred_check
      _
    $region3: #{head_forward.1} parent=1 // pred_check_branch
      %9 = sbr.rel (0) target = $region5
    $region4: #{head_forward.1} parent=1 // pred_region
      %11 = vsyncadd [#allocation3], 0
      %s12 = sshll.u32 %s0, 4
      %s13 = int_to_ptr.hbm [resolvable:$true] %s12
      %s14 = sshll.u32 [#allocation2], 4
      %s15 = int_to_ptr.vmem [resolvable:$true] %s14
      %20 = dma.hbm_to_vmem [thread:$0]  %s13, 12288, %s15, [#allocation3], 384, 384, 24
    $region5: #{head_forward.1} parent=1 // pred_fallthru
      _
    // Predicated region
    $region6: #{head_forward.1} parent=1 // pred_check
      _
    $region7: #{head_forward.1} parent=1 // pred_check_branch
      %22 = sbr.rel (0) target = $region9
    $region8: #{head_forward.1} parent=1 // pred_region
      _
    $region9: #{head_forward.1} parent=1 // pred_fallthru
      _
    // Predicated region
    $region10: #{head_forward.1} parent=1 // pred_check
      _
    $region11: #{head_forward.1} parent=1 // pred_check_branch
      %24 = sbr.rel (0) target = $region13
    $region12: #{head_forward.1} parent=1 // pred_region
      %26 = dma.done [#allocation3], 12288
    $region13: #{head_forward.1} parent=1 // pred_fallthru
      _
    %v27 = vld [vmem:[#allocation2] sm:$0xff]
    %v28 = vld [vmem:[#allocation2 + $0x8] sm:$0xff]
    %v29 = vld [vmem:[#allocation2 + $0x10] sm:$0xff]
    %v30 = vld [vmem:[#allocation2 + $0x18] sm:$0xff]
    %v31 = vld [vmem:[#allocation2 + $0x20] sm:$0xff]
    %v32 = vld [vmem:[#allocation2 + $0x28] sm:$0xff]
    %v33 = vld [vmem:[#allocation2 + $0x30] sm:$0xff]
    %v34 = vld [vmem:[#allocation2 + $0x38] sm:$0xff]
    %v35 = vld [vmem:[#allocation2 + $0x40] sm:$0xff]
    %v36 = vld [vmem:[#allocation2 + $0x48] sm:$0xff]
    %v37 = vld [vmem:[#allocation2 + $0x50] sm:$0xff]
    %v38 = vld [vmem:[#allocation2 + $0x58] sm:$0xff]
    %v39 = vld [vmem:[#allocation2 + $0x60] sm:$0xff]
    %v40 = vld [vmem:[#allocation2 + $0x68] sm:$0xff]
    %v41 = vld [vmem:[#allocation2 + $0x70] sm:$0xff]
    %v42 = vld [vmem:[#allocation2 + $0x78] sm:$0xff]
    %v43 = vld [vmem:[#allocation2 + $0x80] sm:$0xff]
    %v44 = vld [vmem:[#allocation2 + $0x88] sm:$0xff]
    %v45 = vld [vmem:[#allocation2 + $0x90] sm:$0xff]
    %v46 = vld [vmem:[#allocation2 + $0x98] sm:$0xff]
    %v47 = vld [vmem:[#allocation2 + $0xa0] sm:$0xff]
    %v48 = vld [vmem:[#allocation2 + $0xa8] sm:$0xff]
    %v49 = vld [vmem:[#allocation2 + $0xb0] sm:$0xff]
    %v50 = vld [vmem:[#allocation2 + $0xb8] sm:$0xff]
    %v51 = vld [vmem:[#allocation2 + $0xc0] sm:$0xff]
    %v52 = vld [vmem:[#allocation2 + $0xc8] sm:$0xff]
    %v53 = vld [vmem:[#allocation2 + $0xd0] sm:$0xff]
    %v54 = vld [vmem:[#allocation2 + $0xd8] sm:$0xff]
    %v55 = vld [vmem:[#allocation2 + $0xe0] sm:$0xff]
    %v56 = vld [vmem:[#allocation2 + $0xe8] sm:$0xff]
    %v57 = vld [vmem:[#allocation2 + $0xf0] sm:$0xff]
    %v58 = vld [vmem:[#allocation2 + $0xf8] sm:$0xff]
    %v59 = vld [vmem:[#allocation2 + $0x100] sm:$0xff]
    %v60 = vld [vmem:[#allocation2 + $0x108] sm:$0xff]
    %v61 = vld [vmem:[#allocation2 + $0x110] sm:$0xff]
    %v62 = vld [vmem:[#allocation2 + $0x118] sm:$0xff]
    %v63 = vld [vmem:[#allocation2 + $0x120] sm:$0xff]
    %v64 = vld [vmem:[#allocation2 + $0x128] sm:$0xff]
    %v65 = vld [vmem:[#allocation2 + $0x130] sm:$0xff]
    %v66 = vld [vmem:[#allocation2 + $0x138] sm:$0xff]
    %v67 = vld [vmem:[#allocation2 + $0x140] sm:$0xff]
    %v68 = vld [vmem:[#allocation2 + $0x148] sm:$0xff]
    %v69 = vld [vmem:[#allocation2 + $0x150] sm:$0xff]
    %v70 = vld [vmem:[#allocation2 + $0x158] sm:$0xff]
    %v71 = vld [vmem:[#allocation2 + $0x160] sm:$0xff]
    %v72 = vld [vmem:[#allocation2 + $0x168] sm:$0xff]
    %v73 = vld [vmem:[#allocation2 + $0x170] sm:$0xff]
    %v74 = vld [vmem:[#allocation2 + $0x178] sm:$0xff]
    %v75 = vld [vmem:[#allocation2 + $0x180] sm:$0xff]
    %v76 = vld [vmem:[#allocation2 + $0x188] sm:$0xff]
    %v77 = vld [vmem:[#allocation2 + $0x190] sm:$0xff]
    %v78 = vld [vmem:[#allocation2 + $0x198] sm:$0xff]
    %v79 = vld [vmem:[#allocation2 + $0x1a0] sm:$0xff]
    %v80 = vld [vmem:[#allocation2 + $0x1a8] sm:$0xff]
    %v81 = vld [vmem:[#allocation2 + $0x1b0] sm:$0xff]
    %v82 = vld [vmem:[#allocation2 + $0x1b8] sm:$0xff]
    %v83 = vld [vmem:[#allocation2 + $0x1c0] sm:$0xff]
    %v84 = vld [vmem:[#allocation2 + $0x1c8] sm:$0xff]
    %v85 = vld [vmem:[#allocation2 + $0x1d0] sm:$0xff]
    %v86 = vld [vmem:[#allocation2 + $0x1d8] sm:$0xff]
    %v87 = vld [vmem:[#allocation2 + $0x1e0] sm:$0xff]
    %v88 = vld [vmem:[#allocation2 + $0x1e8] sm:$0xff]
    %v89 = vld [vmem:[#allocation2 + $0x1f0] sm:$0xff]
    %v90 = vld [vmem:[#allocation2 + $0x1f8] sm:$0xff]
    %v91 = vld [vmem:[#allocation2 + $0x200] sm:$0xff]
    %v92 = vld [vmem:[#allocation2 + $0x208] sm:$0xff]
    %v93 = vld [vmem:[#allocation2 + $0x210] sm:$0xff]
    %v94 = vld [vmem:[#allocation2 + $0x218] sm:$0xff]
    %v95 = vld [vmem:[#allocation2 + $0x220] sm:$0xff]
    %v96 = vld [vmem:[#allocation2 + $0x228] sm:$0xff]
    %v97 = vld [vmem:[#allocation2 + $0x230] sm:$0xff]
    %v98 = vld [vmem:[#allocation2 + $0x238] sm:$0xff]
    %v99 = vld [vmem:[#allocation2 + $0x240] sm:$0xff]
    %v100 = vld [vmem:[#allocation2 + $0x248] sm:$0xff]
    %v101 = vld [vmem:[#allocation2 + $0x250] sm:$0xff]
    %v102 = vld [vmem:[#allocation2 + $0x258] sm:$0xff]
    %v103 = vld [vmem:[#allocation2 + $0x260] sm:$0xff]
    %v104 = vld [vmem:[#allocation2 + $0x268] sm:$0xff]
    %v105 = vld [vmem:[#allocation2 + $0x270] sm:$0xff]
    %v106 = vld [vmem:[#allocation2 + $0x278] sm:$0xff]
    %v107 = vld [vmem:[#allocation2 + $0x280] sm:$0xff]
    %v108 = vld [vmem:[#allocation2 + $0x288] sm:$0xff]
    %v109 = vld [vmem:[#allocation2 + $0x290] sm:$0xff]
    %v110 = vld [vmem:[#allocation2 + $0x298] sm:$0xff]
    %v111 = vld [vmem:[#allocation2 + $0x2a0] sm:$0xff]
    %v112 = vld [vmem:[#allocation2 + $0x2a8] sm:$0xff]
    %v113 = vld [vmem:[#allocation2 + $0x2b0] sm:$0xff]
    %v114 = vld [vmem:[#allocation2 + $0x2b8] sm:$0xff]
    %v115 = vld [vmem:[#allocation2 + $0x2c0] sm:$0xff]
    %v116 = vld [vmem:[#allocation2 + $0x2c8] sm:$0xff]
    %v117 = vld [vmem:[#allocation2 + $0x2d0] sm:$0xff]
    %v118 = vld [vmem:[#allocation2 + $0x2d8] sm:$0xff]
    %v119 = vld [vmem:[#allocation2 + $0x2e0] sm:$0xff]
    %v120 = vld [vmem:[#allocation2 + $0x2e8] sm:$0xff]
    %v121 = vld [vmem:[#allocation2 + $0x2f0] sm:$0xff]
    %v122 = vld [vmem:[#allocation2 + $0x2f8] sm:$0xff]
    %v123 = vpack.c.bf16 %v30, %v27
    %v124 = vpack.c.bf16 %v31, %v28
    %v125 = vpack.c.bf16 %v32, %v29
    %v126 = vpack.c.bf16 %v36, %v33
    %v127 = vpack.c.bf16 %v37, %v34
    %v128 = vpack.c.bf16 %v38, %v35
    %v129 = vpack.c.bf16 %v42, %v39
    %v130 = vpack.c.bf16 %v43, %v40
    %v131 = vpack.c.bf16 %v44, %v41
    %v132 = vpack.c.bf16 %v48, %v45
    %v133 = vpack.c.bf16 %v49, %v46
    %v134 = vpack.c.bf16 %v50, %v47
    %v135 = vpack.c.bf16 %v54, %v51
    %v136 = vpack.c.bf16 %v55, %v52
    %v137 = vpack.c.bf16 %v56, %v53
    %v138 = vpack.c.bf16 %v60, %v57
    %v139 = vpack.c.bf16 %v61, %v58
    %v140 = vpack.c.bf16 %v62, %v59
    %v141 = vpack.c.bf16 %v66, %v63
    %v142 = vpack.c.bf16 %v67, %v64
    %v143 = vpack.c.bf16 %v68, %v65
    %v144 = vpack.c.bf16 %v72, %v69
    %v145 = vpack.c.bf16 %v73, %v70
    %v146 = vpack.c.bf16 %v74, %v71
    %v147 = vpack.c.bf16 %v78, %v75
    %v148 = vpack.c.bf16 %v79, %v76
    %v149 = vpack.c.bf16 %v80, %v77
    %v150 = vpack.c.bf16 %v84, %v81
    %v151 = vpack.c.bf16 %v85, %v82
    %v152 = vpack.c.bf16 %v86, %v83
    %v153 = vpack.c.bf16 %v90, %v87
    %v154 = vpack.c.bf16 %v91, %v88
    %v155 = vpack.c.bf16 %v92, %v89
    %v156 = vpack.c.bf16 %v96, %v93
    %v157 = vpack.c.bf16 %v97, %v94
    %v158 = vpack.c.bf16 %v98, %v95
    %v159 = vpack.c.bf16 %v102, %v99
    %v160 = vpack.c.bf16 %v103, %v100
    %v161 = vpack.c.bf16 %v104, %v101
    %v162 = vpack.c.bf16 %v108, %v105
    %v163 = vpack.c.bf16 %v109, %v106
    %v164 = vpack.c.bf16 %v110, %v107
    %v165 = vpack.c.bf16 %v114, %v111
    %v166 = vpack.c.bf16 %v115, %v112
    %v167 = vpack.c.bf16 %v116, %v113
    %v168 = vpack.c.bf16 %v120, %v117
    %v169 = vpack.c.bf16 %v121, %v118
    %v170 = vpack.c.bf16 %v122, %v119
    %v171 = vld [vmem:[%s1] sm:$0xff]
    %v172 = vld [vmem:[%s1 + $0x8] sm:$0xff]
    %v173 = vld [vmem:[%s1 + $0x10] sm:$0xff]
    %v174 = vld [vmem:[%s1 + $0x18] sm:$0xff]
    %v175 = vld [vmem:[%s1 + $0x20] sm:$0xff]
    %v176 = vld [vmem:[%s1 + $0x28] sm:$0xff]
    %v177 = vld [vmem:[%s1 + $0x30] sm:$0xff]
    %v178 = vld [vmem:[%s1 + $0x38] sm:$0xff]
    %v179 = vld [vmem:[%s1 + $0x40] sm:$0xff]
    %v180 = vld [vmem:[%s1 + $0x48] sm:$0xff]
    %v181 = vld [vmem:[%s1 + $0x50] sm:$0xff]
    %v182 = vld [vmem:[%s1 + $0x58] sm:$0xff]
    %v183 = vld [vmem:[%s1 + $0x60] sm:$0xff]
    %v184 = vld [vmem:[%s1 + $0x68] sm:$0xff]
    %v185 = vld [vmem:[%s1 + $0x70] sm:$0xff]
    %v186 = vld [vmem:[%s1 + $0x78] sm:$0xff]
    %v187 = vld [vmem:[%s1 + $0x80] sm:$0xff]
    %v188 = vld [vmem:[%s1 + $0x88] sm:$0xff]
    %v189 = vld [vmem:[%s1 + $0x90] sm:$0xff]
    %v190 = vld [vmem:[%s1 + $0x98] sm:$0xff]
    %v191 = vld [vmem:[%s1 + $0xa0] sm:$0xff]
    %v192 = vld [vmem:[%s1 + $0xa8] sm:$0xff]
    %v193 = vld [vmem:[%s1 + $0xb0] sm:$0xff]
    %v194 = vld [vmem:[%s1 + $0xb8] sm:$0xff]
    %v195 = vld [vmem:[%s1 + $0xc0] sm:$0xff]
    %v196 = vld [vmem:[%s1 + $0xc8] sm:$0xff]
    %v197 = vld [vmem:[%s1 + $0xd0] sm:$0xff]
    %v198 = vld [vmem:[%s1 + $0xd8] sm:$0xff]
    %v199 = vld [vmem:[%s1 + $0xe0] sm:$0xff]
    %v200 = vld [vmem:[%s1 + $0xe8] sm:$0xff]
    %v201 = vld [vmem:[%s1 + $0xf0] sm:$0xff]
    %v202 = vld [vmem:[%s1 + $0xf8] sm:$0xff]
    %v203 = vld [vmem:[%s1 + $0x100] sm:$0xff]
    %v204 = vld [vmem:[%s1 + $0x108] sm:$0xff]
    %v205 = vld [vmem:[%s1 + $0x110] sm:$0xff]
    %v206 = vld [vmem:[%s1 + $0x118] sm:$0xff]
    %v207 = vld [vmem:[%s1 + $0x120] sm:$0xff]
    %v208 = vld [vmem:[%s1 + $0x128] sm:$0xff]
    %v209 = vld [vmem:[%s1 + $0x130] sm:$0xff]
    %v210 = vld [vmem:[%s1 + $0x138] sm:$0xff]
    %v211 = vld [vmem:[%s1 + $0x140] sm:$0xff]
    %v212 = vld [vmem:[%s1 + $0x148] sm:$0xff]
    %v213 = vld [vmem:[%s1 + $0x150] sm:$0xff]
    %v214 = vld [vmem:[%s1 + $0x158] sm:$0xff]
    %v215 = vld [vmem:[%s1 + $0x160] sm:$0xff]
    %v216 = vld [vmem:[%s1 + $0x168] sm:$0xff]
    %v217 = vld [vmem:[%s1 + $0x170] sm:$0xff]
    %v218 = vld [vmem:[%s1 + $0x178] sm:$0xff]
    %v267 = vunpack.c.l.b16 %v171
    %v268 = vunpack.c.h.b16 %v171
    %v269 = vunpack.c.l.b16 %v172
    %v270 = vunpack.c.h.b16 %v172
    %v271 = vunpack.c.l.b16 %v173
    %v272 = vunpack.c.h.b16 %v173
    %v273 = vunpack.c.l.b16 %v174
    %v274 = vunpack.c.h.b16 %v174
    %v275 = vunpack.c.l.b16 %v175
    %v276 = vunpack.c.h.b16 %v175
    %v277 = vunpack.c.l.b16 %v176
    %v278 = vunpack.c.h.b16 %v176
    %v279 = vunpack.c.l.b16 %v177
    %v280 = vunpack.c.h.b16 %v177
    %v281 = vunpack.c.l.b16 %v178
    %v282 = vunpack.c.h.b16 %v178
    %v283 = vunpack.c.l.b16 %v179
    %v284 = vunpack.c.h.b16 %v179
    %v285 = vunpack.c.l.b16 %v180
    %v286 = vunpack.c.h.b16 %v180
    %v287 = vunpack.c.l.b16 %v181
    %v288 = vunpack.c.h.b16 %v181
    %v289 = vunpack.c.l.b16 %v182
    %v290 = vunpack.c.h.b16 %v182
    %v291 = vunpack.c.l.b16 %v183
    %v292 = vunpack.c.h.b16 %v183
    %v293 = vunpack.c.l.b16 %v184
    %v294 = vunpack.c.h.b16 %v184
    %v295 = vunpack.c.l.b16 %v185
    %v296 = vunpack.c.h.b16 %v185
    %v297 = vunpack.c.l.b16 %v186
    %v298 = vunpack.c.h.b16 %v186
    %v299 = vunpack.c.l.b16 %v187
    %v300 = vunpack.c.h.b16 %v187
    %v301 = vunpack.c.l.b16 %v188
    %v302 = vunpack.c.h.b16 %v188
    %v303 = vunpack.c.l.b16 %v189
    %v304 = vunpack.c.h.b16 %v189
    %v305 = vunpack.c.l.b16 %v190
    %v306 = vunpack.c.h.b16 %v190
    %v307 = vunpack.c.l.b16 %v191
    %v308 = vunpack.c.h.b16 %v191
    %v309 = vunpack.c.l.b16 %v192
    %v310 = vunpack.c.h.b16 %v192
    %v311 = vunpack.c.l.b16 %v193
    %v312 = vunpack.c.h.b16 %v193
    %v313 = vunpack.c.l.b16 %v194
    %v314 = vunpack.c.h.b16 %v194
    %v315 = vunpack.c.l.b16 %v195
    %v316 = vunpack.c.h.b16 %v195
    %v317 = vunpack.c.l.b16 %v196
    %v318 = vunpack.c.h.b16 %v196
    %v319 = vunpack.c.l.b16 %v197
    %v320 = vunpack.c.h.b16 %v197
    %v321 = vunpack.c.l.b16 %v198
    %v322 = vunpack.c.h.b16 %v198
    %v323 = vunpack.c.l.b16 %v199
    %v324 = vunpack.c.h.b16 %v199
    %v325 = vunpack.c.l.b16 %v200
    %v326 = vunpack.c.h.b16 %v200
    %v327 = vunpack.c.l.b16 %v201
    %v328 = vunpack.c.h.b16 %v201
    %v329 = vunpack.c.l.b16 %v202
    %v330 = vunpack.c.h.b16 %v202
    %v331 = vunpack.c.l.b16 %v203
    %v332 = vunpack.c.h.b16 %v203
    %v333 = vunpack.c.l.b16 %v204
    %v334 = vunpack.c.h.b16 %v204
    %v335 = vunpack.c.l.b16 %v205
    %v336 = vunpack.c.h.b16 %v205
    %v337 = vunpack.c.l.b16 %v206
    %v338 = vunpack.c.h.b16 %v206
    %v339 = vunpack.c.l.b16 %v207
    %v340 = vunpack.c.h.b16 %v207
    %v341 = vunpack.c.l.b16 %v208
    %v342 = vunpack.c.h.b16 %v208
    %v343 = vunpack.c.l.b16 %v209
    %v344 = vunpack.c.h.b16 %v209
    %v345 = vunpack.c.l.b16 %v210
    %v346 = vunpack.c.h.b16 %v210
    %v347 = vunpack.c.l.b16 %v211
    %v348 = vunpack.c.h.b16 %v211
    %v349 = vunpack.c.l.b16 %v212
    %v350 = vunpack.c.h.b16 %v212
    %v351 = vunpack.c.l.b16 %v213
    %v352 = vunpack.c.h.b16 %v213
    %v353 = vunpack.c.l.b16 %v214
    %v354 = vunpack.c.h.b16 %v214
    %v355 = vunpack.c.l.b16 %v215
    %v356 = vunpack.c.h.b16 %v215
    %v357 = vunpack.c.l.b16 %v216
    %v358 = vunpack.c.h.b16 %v216
    %v359 = vunpack.c.l.b16 %v217
    %v360 = vunpack.c.h.b16 %v217
    %v361 = vunpack.c.l.b16 %v218
    %v362 = vunpack.c.h.b16 %v218
    %v363 = vpack.c.b16 %v269, %v267
    %v364 = vpack.c.b16 %v270, %v268
    %v365 = vpack.c.b16 %v273, %v271
    %v366 = vpack.c.b16 %v274, %v272
    %v367 = vpack.c.b16 %v277, %v275
    %v368 = vpack.c.b16 %v278, %v276
    %v369 = vpack.c.b16 %v281, %v279
    %v370 = vpack.c.b16 %v282, %v280
    %v371 = vpack.c.b16 %v285, %v283
    %v372 = vpack.c.b16 %v286, %v284
    %v373 = vpack.c.b16 %v289, %v287
    %v374 = vpack.c.b16 %v290, %v288
    %v375 = vpack.c.b16 %v293, %v291
    %v376 = vpack.c.b16 %v294, %v292
    %v377 = vpack.c.b16 %v297, %v295
    %v378 = vpack.c.b16 %v298, %v296
    %v379 = vpack.c.b16 %v301, %v299
    %v380 = vpack.c.b16 %v302, %v300
    %v381 = vpack.c.b16 %v305, %v303
    %v382 = vpack.c.b16 %v306, %v304
    %v383 = vpack.c.b16 %v309, %v307
    %v384 = vpack.c.b16 %v310, %v308
    %v385 = vpack.c.b16 %v313, %v311
    %v386 = vpack.c.b16 %v314, %v312
    %v387 = vpack.c.b16 %v317, %v315
    %v388 = vpack.c.b16 %v318, %v316
    %v389 = vpack.c.b16 %v321, %v319
    %v390 = vpack.c.b16 %v322, %v320
    %v391 = vpack.c.b16 %v325, %v323
    %v392 = vpack.c.b16 %v326, %v324
    %v393 = vpack.c.b16 %v329, %v327
    %v394 = vpack.c.b16 %v330, %v328
    %v395 = vpack.c.b16 %v333, %v331
    %v396 = vpack.c.b16 %v334, %v332
    %v397 = vpack.c.b16 %v337, %v335
    %v398 = vpack.c.b16 %v338, %v336
    %v399 = vpack.c.b16 %v341, %v339
    %v400 = vpack.c.b16 %v342, %v340
    %v401 = vpack.c.b16 %v345, %v343
    %v402 = vpack.c.b16 %v346, %v344
    %v403 = vpack.c.b16 %v349, %v347
    %v404 = vpack.c.b16 %v350, %v348
    %v405 = vpack.c.b16 %v353, %v351
    %v406 = vpack.c.b16 %v354, %v352
    %v407 = vpack.c.b16 %v357, %v355
    %v408 = vpack.c.b16 %v358, %v356
    %v409 = vpack.c.b16 %v361, %v359
    %v410 = vpack.c.b16 %v362, %v360
    %459 = vmatpush.bf16.msra.mxu0 %v377
    %460 = vmatpush.bf16.msra.mxu0 %v375
    %461 = vmatpush.bf16.msra.mxu0 %v373
    %462 = vmatpush.bf16.msra.mxu0 %v371
    %463 = vmatpush.bf16.msra.mxu0 %v369
    %464 = vmatpush.bf16.msra.mxu0 %v367
    %465 = vmatpush.bf16.msra.mxu0 %v365
    %466 = vmatpush.bf16.msra.mxu0 %v363
    %467 = vmatmul.bf16.gmra.mxu0 %v123
    %v468 = vpop.f32.mrf.mxu0
    %v469 = vadd.f32 0.0, %v468
    %v470 = vpop.f32.mrf.mxu0
    %v471 = vadd.f32 0.0, %v470
    %472 = vmatmul.bf16.gmra.mxu0 %v126
    %v473 = vpop.f32.mrf.mxu0
    %v474 = vadd.f32 0.0, %v473
    %v475 = vpop.f32.mrf.mxu0
    %v476 = vadd.f32 0.0, %v475
    %477 = vmatmul.bf16.gmra.mxu0 %v129
    %v478 = vpop.f32.mrf.mxu0
    %v479 = vadd.f32 0.0, %v478
    %v480 = vpop.f32.mrf.mxu0
    %v481 = vadd.f32 0.0, %v480
    %482 = vmatmul.bf16.gmra.mxu0 %v132
    %v483 = vpop.f32.mrf.mxu0
    %v484 = vadd.f32 0.0, %v483
    %v485 = vpop.f32.mrf.mxu0
    %v486 = vadd.f32 0.0, %v485
    %487 = vmatmul.bf16.gmra.mxu0 %v135
    %v488 = vpop.f32.mrf.mxu0
    %v489 = vadd.f32 0.0, %v488
    %v490 = vpop.f32.mrf.mxu0
    %v491 = vadd.f32 0.0, %v490
    %492 = vmatmul.bf16.gmra.mxu0 %v138
    %v493 = vpop.f32.mrf.mxu0
    %v494 = vadd.f32 0.0, %v493
    %v495 = vpop.f32.mrf.mxu0
    %v496 = vadd.f32 0.0, %v495
    %497 = vmatmul.bf16.gmra.mxu0 %v141
    %v498 = vpop.f32.mrf.mxu0
    %v499 = vadd.f32 0.0, %v498
    %v500 = vpop.f32.mrf.mxu0
    %v501 = vadd.f32 0.0, %v500
    %502 = vmatmul.bf16.gmra.mxu0 %v144
    %v503 = vpop.f32.mrf.mxu0
    %v504 = vadd.f32 0.0, %v503
    %v505 = vpop.f32.mrf.mxu0
    %v506 = vadd.f32 0.0, %v505
    %507 = vmatmul.bf16.gmra.mxu0 %v147
    %v508 = vpop.f32.mrf.mxu0
    %v509 = vadd.f32 0.0, %v508
    %v510 = vpop.f32.mrf.mxu0
    %v511 = vadd.f32 0.0, %v510
    %512 = vmatmul.bf16.gmra.mxu0 %v150
    %v513 = vpop.f32.mrf.mxu0
    %v514 = vadd.f32 0.0, %v513
    %v515 = vpop.f32.mrf.mxu0
    %v516 = vadd.f32 0.0, %v515
    %517 = vmatmul.bf16.gmra.mxu0 %v153
    %v518 = vpop.f32.mrf.mxu0
    %v519 = vadd.f32 0.0, %v518
    %v520 = vpop.f32.mrf.mxu0
    %v521 = vadd.f32 0.0, %v520
    %522 = vmatmul.bf16.gmra.mxu0 %v156
    %v523 = vpop.f32.mrf.mxu0
    %v524 = vadd.f32 0.0, %v523
    %v525 = vpop.f32.mrf.mxu0
    %v526 = vadd.f32 0.0, %v525
    %527 = vmatmul.bf16.gmra.mxu0 %v159
    %v528 = vpop.f32.mrf.mxu0
    %v529 = vadd.f32 0.0, %v528
    %v530 = vpop.f32.mrf.mxu0
    %v531 = vadd.f32 0.0, %v530
    %532 = vmatmul.bf16.gmra.mxu0 %v162
    %v533 = vpop.f32.mrf.mxu0
    %v534 = vadd.f32 0.0, %v533
    %v535 = vpop.f32.mrf.mxu0
    %v536 = vadd.f32 0.0, %v535
    %537 = vmatmul.bf16.gmra.mxu0 %v165
    %v538 = vpop.f32.mrf.mxu0
    %v539 = vadd.f32 0.0, %v538
    %v540 = vpop.f32.mrf.mxu0
    %v541 = vadd.f32 0.0, %v540
    %542 = vmatmul.bf16.gmra.mxu0 %v168
    %v543 = vpop.f32.mrf.mxu0
    %v544 = vadd.f32 0.0, %v543
    %v545 = vpop.f32.mrf.mxu0
    %v546 = vadd.f32 0.0, %v545
    %547 = vdwg.mxu0
    %548 = vmatpush.bf16.msra.mxu0 %v393
    %549 = vmatpush.bf16.msra.mxu0 %v391
    %550 = vmatpush.bf16.msra.mxu0 %v389
    %551 = vmatpush.bf16.msra.mxu0 %v387
    %552 = vmatpush.bf16.msra.mxu0 %v385
    %553 = vmatpush.bf16.msra.mxu0 %v383
    %554 = vmatpush.bf16.msra.mxu0 %v381
    %555 = vmatpush.bf16.msra.mxu0 %v379
    %556 = vmatmul.bf16.gmra.mxu0 %v124
    %v557 = vpop.f32.mrf.mxu0
    %v558 = vadd.f32 %v469, %v557
    %v559 = vpop.f32.mrf.mxu0
    %v560 = vadd.f32 %v471, %v559
    %561 = vmatmul.bf16.gmra.mxu0 %v127
    %v562 = vpop.f32.mrf.mxu0
    %v563 = vadd.f32 %v474, %v562
    %v564 = vpop.f32.mrf.mxu0
    %v565 = vadd.f32 %v476, %v564
    %566 = vmatmul.bf16.gmra.mxu0 %v130
    %v567 = vpop.f32.mrf.mxu0
    %v568 = vadd.f32 %v479, %v567
    %v569 = vpop.f32.mrf.mxu0
    %v570 = vadd.f32 %v481, %v569
    %571 = vmatmul.bf16.gmra.mxu0 %v133
    %v572 = vpop.f32.mrf.mxu0
    %v573 = vadd.f32 %v484, %v572
    %v574 = vpop.f32.mrf.mxu0
    %v575 = vadd.f32 %v486, %v574
    %576 = vmatmul.bf16.gmra.mxu0 %v136
    %v577 = vpop.f32.mrf.mxu0
    %v578 = vadd.f32 %v489, %v577
    %v579 = vpop.f32.mrf.mxu0
    %v580 = vadd.f32 %v491, %v579
    %581 = vmatmul.bf16.gmra.mxu0 %v139
    %v582 = vpop.f32.mrf.mxu0
    %v583 = vadd.f32 %v494, %v582
    %v584 = vpop.f32.mrf.mxu0
    %v585 = vadd.f32 %v496, %v584
    %586 = vmatmul.bf16.gmra.mxu0 %v142
    %v587 = vpop.f32.mrf.mxu0
    %v588 = vadd.f32 %v499, %v587
    %v589 = vpop.f32.mrf.mxu0
    %v590 = vadd.f32 %v501, %v589
    %591 = vmatmul.bf16.gmra.mxu0 %v145
    %v592 = vpop.f32.mrf.mxu0
    %v593 = vadd.f32 %v504, %v592
    %v594 = vpop.f32.mrf.mxu0
    %v595 = vadd.f32 %v506, %v594
    %596 = vmatmul.bf16.gmra.mxu0 %v148
    %v597 = vpop.f32.mrf.mxu0
    %v598 = vadd.f32 %v509, %v597
    %v599 = vpop.f32.mrf.mxu0
    %v600 = vadd.f32 %v511, %v599
    %601 = vmatmul.bf16.gmra.mxu0 %v151
    %v602 = vpop.f32.mrf.mxu0
    %v603 = vadd.f32 %v514, %v602
    %v604 = vpop.f32.mrf.mxu0
    %v605 = vadd.f32 %v516, %v604
    %606 = vmatmul.bf16.gmra.mxu0 %v154
    %v607 = vpop.f32.mrf.mxu0
    %v608 = vadd.f32 %v519, %v607
    %v609 = vpop.f32.mrf.mxu0
    %v610 = vadd.f32 %v521, %v609
    %611 = vmatmul.bf16.gmra.mxu0 %v157
    %v612 = vpop.f32.mrf.mxu0
    %v613 = vadd.f32 %v524, %v612
    %v614 = vpop.f32.mrf.mxu0
    %v615 = vadd.f32 %v526, %v614
    %616 = vmatmul.bf16.gmra.mxu0 %v160
    %v617 = vpop.f32.mrf.mxu0
    %v618 = vadd.f32 %v529, %v617
    %v619 = vpop.f32.mrf.mxu0
    %v620 = vadd.f32 %v531, %v619
    %621 = vmatmul.bf16.gmra.mxu0 %v163
    %v622 = vpop.f32.mrf.mxu0
    %v623 = vadd.f32 %v534, %v622
    %v624 = vpop.f32.mrf.mxu0
    %v625 = vadd.f32 %v536, %v624
    %626 = vmatmul.bf16.gmra.mxu0 %v166
    %v627 = vpop.f32.mrf.mxu0
    %v628 = vadd.f32 %v539, %v627
    %v629 = vpop.f32.mrf.mxu0
    %v630 = vadd.f32 %v541, %v629
    %631 = vmatmul.bf16.gmra.mxu0 %v169
    %v632 = vpop.f32.mrf.mxu0
    %v633 = vadd.f32 %v544, %v632
    %v634 = vpop.f32.mrf.mxu0
    %v635 = vadd.f32 %v546, %v634
    %636 = vdwg.mxu0
    %637 = vmatpush.bf16.msra.mxu0 %v409
    %638 = vmatpush.bf16.msra.mxu0 %v407
    %639 = vmatpush.bf16.msra.mxu0 %v405
    %640 = vmatpush.bf16.msra.mxu0 %v403
    %641 = vmatpush.bf16.msra.mxu0 %v401
    %642 = vmatpush.bf16.msra.mxu0 %v399
    %643 = vmatpush.bf16.msra.mxu0 %v397
    %644 = vmatpush.bf16.msra.mxu0 %v395
    %645 = vmatmul.bf16.gmra.mxu0 %v125
    %v646 = vpop.f32.mrf.mxu0
    %v647 = vadd.f32 %v558, %v646
    %v648 = vpop.f32.mrf.mxu0
    %v649 = vadd.f32 %v560, %v648
    %650 = vmatmul.bf16.gmra.mxu0 %v128
    %v651 = vpop.f32.mrf.mxu0
    %v652 = vadd.f32 %v563, %v651
    %v653 = vpop.f32.mrf.mxu0
    %v654 = vadd.f32 %v565, %v653
    %655 = vmatmul.bf16.gmra.mxu0 %v131
    %v656 = vpop.f32.mrf.mxu0
    %v657 = vadd.f32 %v568, %v656
    %v658 = vpop.f32.mrf.mxu0
    %v659 = vadd.f32 %v570, %v658
    %660 = vmatmul.bf16.gmra.mxu0 %v134
    %v661 = vpop.f32.mrf.mxu0
    %v662 = vadd.f32 %v573, %v661
    %v663 = vpop.f32.mrf.mxu0
    %v664 = vadd.f32 %v575, %v663
    %665 = vmatmul.bf16.gmra.mxu0 %v137
    %v666 = vpop.f32.mrf.mxu0
    %v667 = vadd.f32 %v578, %v666
    %v668 = vpop.f32.mrf.mxu0
    %v669 = vadd.f32 %v580, %v668
    %670 = vmatmul.bf16.gmra.mxu0 %v140
    %v671 = vpop.f32.mrf.mxu0
    %v672 = vadd.f32 %v583, %v671
    %v673 = vpop.f32.mrf.mxu0
    %v674 = vadd.f32 %v585, %v673
    %675 = vmatmul.bf16.gmra.mxu0 %v143
    %v676 = vpop.f32.mrf.mxu0
    %v677 = vadd.f32 %v588, %v676
    %v678 = vpop.f32.mrf.mxu0
    %v679 = vadd.f32 %v590, %v678
    %680 = vmatmul.bf16.gmra.mxu0 %v146
    %v681 = vpop.f32.mrf.mxu0
    %v682 = vadd.f32 %v593, %v681
    %v683 = vpop.f32.mrf.mxu0
    %v684 = vadd.f32 %v595, %v683
    %685 = vmatmul.bf16.gmra.mxu0 %v149
    %v686 = vpop.f32.mrf.mxu0
    %v687 = vadd.f32 %v598, %v686
    %v688 = vpop.f32.mrf.mxu0
    %v689 = vadd.f32 %v600, %v688
    %690 = vmatmul.bf16.gmra.mxu0 %v152
    %v691 = vpop.f32.mrf.mxu0
    %v692 = vadd.f32 %v603, %v691
    %v693 = vpop.f32.mrf.mxu0
    %v694 = vadd.f32 %v605, %v693
    %695 = vmatmul.bf16.gmra.mxu0 %v155
    %v696 = vpop.f32.mrf.mxu0
    %v697 = vadd.f32 %v608, %v696
    %v698 = vpop.f32.mrf.mxu0
    %v699 = vadd.f32 %v610, %v698
    %700 = vmatmul.bf16.gmra.mxu0 %v158
    %v701 = vpop.f32.mrf.mxu0
    %v702 = vadd.f32 %v613, %v701
    %v703 = vpop.f32.mrf.mxu0
    %v704 = vadd.f32 %v615, %v703
    %705 = vmatmul.bf16.gmra.mxu0 %v161
    %v706 = vpop.f32.mrf.mxu0
    %v707 = vadd.f32 %v618, %v706
    %v708 = vpop.f32.mrf.mxu0
    %v709 = vadd.f32 %v620, %v708
    %710 = vmatmul.bf16.gmra.mxu0 %v164
    %v711 = vpop.f32.mrf.mxu0
    %v712 = vadd.f32 %v623, %v711
    %v713 = vpop.f32.mrf.mxu0
    %v714 = vadd.f32 %v625, %v713
    %715 = vmatmul.bf16.gmra.mxu0 %v167
    %v716 = vpop.f32.mrf.mxu0
    %v717 = vadd.f32 %v628, %v716
    %v718 = vpop.f32.mrf.mxu0
    %v719 = vadd.f32 %v630, %v718
    %720 = vmatmul.bf16.gmra.mxu0 %v170
    %v721 = vpop.f32.mrf.mxu0
    %v722 = vadd.f32 %v633, %v721
    %v723 = vpop.f32.mrf.mxu0
    %v724 = vadd.f32 %v635, %v723
    %725 = vdwg.mxu0
    %726 = vmatpush.bf16.msra.mxu0 %v378
    %727 = vmatpush.bf16.msra.mxu0 %v376
    %728 = vmatpush.bf16.msra.mxu0 %v374
    %729 = vmatpush.bf16.msra.mxu0 %v372
    %730 = vmatpush.bf16.msra.mxu0 %v370
    %731 = vmatpush.bf16.msra.mxu0 %v368
    %732 = vmatpush.bf16.msra.mxu0 %v366
    %733 = vmatpush.bf16.msra.mxu0 %v364
    %734 = vmatmul.bf16.gmra.mxu0 %v123
    %v735 = vpop.f32.mrf.mxu0
    %v736 = vadd.f32 0.0, %v735
    %v737 = vpop.f32.mrf.mxu0
    %v738 = vadd.f32 0.0, %v737
    %739 = vmatmul.bf16.gmra.mxu0 %v126
    %v740 = vpop.f32.mrf.mxu0
    %v741 = vadd.f32 0.0, %v740
    %v742 = vpop.f32.mrf.mxu0
    %v743 = vadd.f32 0.0, %v742
    %744 = vmatmul.bf16.gmra.mxu0 %v129
    %v745 = vpop.f32.mrf.mxu0
    %v746 = vadd.f32 0.0, %v745
    %v747 = vpop.f32.mrf.mxu0
    %v748 = vadd.f32 0.0, %v747
    %749 = vmatmul.bf16.gmra.mxu0 %v132
    %v750 = vpop.f32.mrf.mxu0
    %v751 = vadd.f32 0.0, %v750
    %v752 = vpop.f32.mrf.mxu0
    %v753 = vadd.f32 0.0, %v752
    %754 = vmatmul.bf16.gmra.mxu0 %v135
    %v755 = vpop.f32.mrf.mxu0
    %v756 = vadd.f32 0.0, %v755
    %v757 = vpop.f32.mrf.mxu0
    %v758 = vadd.f32 0.0, %v757
    %759 = vmatmul.bf16.gmra.mxu0 %v138
    %v760 = vpop.f32.mrf.mxu0
    %v761 = vadd.f32 0.0, %v760
    %v762 = vpop.f32.mrf.mxu0
    %v763 = vadd.f32 0.0, %v762
    %764 = vmatmul.bf16.gmra.mxu0 %v141
    %v765 = vpop.f32.mrf.mxu0
    %v766 = vadd.f32 0.0, %v765
    %v767 = vpop.f32.mrf.mxu0
    %v768 = vadd.f32 0.0, %v767
    %769 = vmatmul.bf16.gmra.mxu0 %v144
    %v770 = vpop.f32.mrf.mxu0
    %v771 = vadd.f32 0.0, %v770
    %v772 = vpop.f32.mrf.mxu0
    %v773 = vadd.f32 0.0, %v772
    %774 = vmatmul.bf16.gmra.mxu0 %v147
    %v775 = vpop.f32.mrf.mxu0
    %v776 = vadd.f32 0.0, %v775
    %v777 = vpop.f32.mrf.mxu0
    %v778 = vadd.f32 0.0, %v777
    %779 = vmatmul.bf16.gmra.mxu0 %v150
    %v780 = vpop.f32.mrf.mxu0
    %v781 = vadd.f32 0.0, %v780
    %v782 = vpop.f32.mrf.mxu0
    %v783 = vadd.f32 0.0, %v782
    %784 = vmatmul.bf16.gmra.mxu0 %v153
    %v785 = vpop.f32.mrf.mxu0
    %v786 = vadd.f32 0.0, %v785
    %v787 = vpop.f32.mrf.mxu0
    %v788 = vadd.f32 0.0, %v787
    %789 = vmatmul.bf16.gmra.mxu0 %v156
    %v790 = vpop.f32.mrf.mxu0
    %v791 = vadd.f32 0.0, %v790
    %v792 = vpop.f32.mrf.mxu0
    %v793 = vadd.f32 0.0, %v792
    %794 = vmatmul.bf16.gmra.mxu0 %v159
    %v795 = vpop.f32.mrf.mxu0
    %v796 = vadd.f32 0.0, %v795
    %v797 = vpop.f32.mrf.mxu0
    %v798 = vadd.f32 0.0, %v797
    %799 = vmatmul.bf16.gmra.mxu0 %v162
    %v800 = vpop.f32.mrf.mxu0
    %v801 = vadd.f32 0.0, %v800
    %v802 = vpop.f32.mrf.mxu0
    %v803 = vadd.f32 0.0, %v802
    %804 = vmatmul.bf16.gmra.mxu0 %v165
    %v805 = vpop.f32.mrf.mxu0
    %v806 = vadd.f32 0.0, %v805
    %v807 = vpop.f32.mrf.mxu0
    %v808 = vadd.f32 0.0, %v807
    %809 = vmatmul.bf16.gmra.mxu0 %v168
    %v810 = vpop.f32.mrf.mxu0
    %v811 = vadd.f32 0.0, %v810
    %v812 = vpop.f32.mrf.mxu0
    %v813 = vadd.f32 0.0, %v812
    %814 = vdwg.mxu0
    %815 = vmatpush.bf16.msra.mxu0 %v394
    %816 = vmatpush.bf16.msra.mxu0 %v392
    %817 = vmatpush.bf16.msra.mxu0 %v390
    %818 = vmatpush.bf16.msra.mxu0 %v388
    %819 = vmatpush.bf16.msra.mxu0 %v386
    %820 = vmatpush.bf16.msra.mxu0 %v384
    %821 = vmatpush.bf16.msra.mxu0 %v382
    %822 = vmatpush.bf16.msra.mxu0 %v380
    %823 = vmatmul.bf16.gmra.mxu0 %v124
    %v824 = vpop.f32.mrf.mxu0
    %v825 = vadd.f32 %v736, %v824
    %v826 = vpop.f32.mrf.mxu0
    %v827 = vadd.f32 %v738, %v826
    %828 = vmatmul.bf16.gmra.mxu0 %v127
    %v829 = vpop.f32.mrf.mxu0
    %v830 = vadd.f32 %v741, %v829
    %v831 = vpop.f32.mrf.mxu0
    %v832 = vadd.f32 %v743, %v831
    %833 = vmatmul.bf16.gmra.mxu0 %v130
    %v834 = vpop.f32.mrf.mxu0
    %v835 = vadd.f32 %v746, %v834
    %v836 = vpop.f32.mrf.mxu0
    %v837 = vadd.f32 %v748, %v836
    %838 = vmatmul.bf16.gmra.mxu0 %v133
    %v839 = vpop.f32.mrf.mxu0
    %v840 = vadd.f32 %v751, %v839
    %v841 = vpop.f32.mrf.mxu0
    %v842 = vadd.f32 %v753, %v841
    %843 = vmatmul.bf16.gmra.mxu0 %v136
    %v844 = vpop.f32.mrf.mxu0
    %v845 = vadd.f32 %v756, %v844
    %v846 = vpop.f32.mrf.mxu0
    %v847 = vadd.f32 %v758, %v846
    %848 = vmatmul.bf16.gmra.mxu0 %v139
    %v849 = vpop.f32.mrf.mxu0
    %v850 = vadd.f32 %v761, %v849
    %v851 = vpop.f32.mrf.mxu0
    %v852 = vadd.f32 %v763, %v851
    %853 = vmatmul.bf16.gmra.mxu0 %v142
    %v854 = vpop.f32.mrf.mxu0
    %v855 = vadd.f32 %v766, %v854
    %v856 = vpop.f32.mrf.mxu0
    %v857 = vadd.f32 %v768, %v856
    %858 = vmatmul.bf16.gmra.mxu0 %v145
    %v859 = vpop.f32.mrf.mxu0
    %v860 = vadd.f32 %v771, %v859
    %v861 = vpop.f32.mrf.mxu0
    %v862 = vadd.f32 %v773, %v861
    %863 = vmatmul.bf16.gmra.mxu0 %v148
    %v864 = vpop.f32.mrf.mxu0
    %v865 = vadd.f32 %v776, %v864
    %v866 = vpop.f32.mrf.mxu0
    %v867 = vadd.f32 %v778, %v866
    %868 = vmatmul.bf16.gmra.mxu0 %v151
    %v869 = vpop.f32.mrf.mxu0
    %v870 = vadd.f32 %v781, %v869
    %v871 = vpop.f32.mrf.mxu0
    %v872 = vadd.f32 %v783, %v871
    %873 = vmatmul.bf16.gmra.mxu0 %v154
    %v874 = vpop.f32.mrf.mxu0
    %v875 = vadd.f32 %v786, %v874
    %v876 = vpop.f32.mrf.mxu0
    %v877 = vadd.f32 %v788, %v876
    %878 = vmatmul.bf16.gmra.mxu0 %v157
    %v879 = vpop.f32.mrf.mxu0
    %v880 = vadd.f32 %v791, %v879
    %v881 = vpop.f32.mrf.mxu0
    %v882 = vadd.f32 %v793, %v881
    %883 = vmatmul.bf16.gmra.mxu0 %v160
    %v884 = vpop.f32.mrf.mxu0
    %v885 = vadd.f32 %v796, %v884
    %v886 = vpop.f32.mrf.mxu0
    %v887 = vadd.f32 %v798, %v886
    %888 = vmatmul.bf16.gmra.mxu0 %v163
    %v889 = vpop.f32.mrf.mxu0
    %v890 = vadd.f32 %v801, %v889
    %v891 = vpop.f32.mrf.mxu0
    %v892 = vadd.f32 %v803, %v891
    %893 = vmatmul.bf16.gmra.mxu0 %v166
    %v894 = vpop.f32.mrf.mxu0
    %v895 = vadd.f32 %v806, %v894
    %v896 = vpop.f32.mrf.mxu0
    %v897 = vadd.f32 %v808, %v896
    %898 = vmatmul.bf16.gmra.mxu0 %v169
    %v899 = vpop.f32.mrf.mxu0
    %v900 = vadd.f32 %v811, %v899
    %v901 = vpop.f32.mrf.mxu0
    %v902 = vadd.f32 %v813, %v901
    %903 = vdwg.mxu0
    %904 = vmatpush.bf16.msra.mxu0 %v410
    %905 = vmatpush.bf16.msra.mxu0 %v408
    %906 = vmatpush.bf16.msra.mxu0 %v406
    %907 = vmatpush.bf16.msra.mxu0 %v404
    %908 = vmatpush.bf16.msra.mxu0 %v402
    %909 = vmatpush.bf16.msra.mxu0 %v400
    %910 = vmatpush.bf16.msra.mxu0 %v398
    %911 = vmatpush.bf16.msra.mxu0 %v396
    %912 = vmatmul.bf16.gmra.mxu0 %v125
    %v913 = vpop.f32.mrf.mxu0
    %v914 = vadd.f32 %v825, %v913
    %v915 = vpop.f32.mrf.mxu0
    %v916 = vadd.f32 %v827, %v915
    %917 = vmatmul.bf16.gmra.mxu0 %v128
    %v918 = vpop.f32.mrf.mxu0
    %v919 = vadd.f32 %v830, %v918
    %v920 = vpop.f32.mrf.mxu0
    %v921 = vadd.f32 %v832, %v920
    %922 = vmatmul.bf16.gmra.mxu0 %v131
    %v923 = vpop.f32.mrf.mxu0
    %v924 = vadd.f32 %v835, %v923
    %v925 = vpop.f32.mrf.mxu0
    %v926 = vadd.f32 %v837, %v925
    %927 = vmatmul.bf16.gmra.mxu0 %v134
    %v928 = vpop.f32.mrf.mxu0
    %v929 = vadd.f32 %v840, %v928
    %v930 = vpop.f32.mrf.mxu0
    %v931 = vadd.f32 %v842, %v930
    %932 = vmatmul.bf16.gmra.mxu0 %v137
    %v933 = vpop.f32.mrf.mxu0
    %v934 = vadd.f32 %v845, %v933
    %v935 = vpop.f32.mrf.mxu0
    %v936 = vadd.f32 %v847, %v935
    %937 = vmatmul.bf16.gmra.mxu0 %v140
    %v938 = vpop.f32.mrf.mxu0
    %v939 = vadd.f32 %v850, %v938
    %v940 = vpop.f32.mrf.mxu0
    %v941 = vadd.f32 %v852, %v940
    %942 = vmatmul.bf16.gmra.mxu0 %v143
    %v943 = vpop.f32.mrf.mxu0
    %v944 = vadd.f32 %v855, %v943
    %v945 = vpop.f32.mrf.mxu0
    %v946 = vadd.f32 %v857, %v945
    %947 = vmatmul.bf16.gmra.mxu0 %v146
    %v948 = vpop.f32.mrf.mxu0
    %v949 = vadd.f32 %v860, %v948
    %v950 = vpop.f32.mrf.mxu0
    %v951 = vadd.f32 %v862, %v950
    %952 = vmatmul.bf16.gmra.mxu0 %v149
    %v953 = vpop.f32.mrf.mxu0
    %v954 = vadd.f32 %v865, %v953
    %v955 = vpop.f32.mrf.mxu0
    %v956 = vadd.f32 %v867, %v955
    %957 = vmatmul.bf16.gmra.mxu0 %v152
    %v958 = vpop.f32.mrf.mxu0
    %v959 = vadd.f32 %v870, %v958
    %v960 = vpop.f32.mrf.mxu0
    %v961 = vadd.f32 %v872, %v960
    %962 = vmatmul.bf16.gmra.mxu0 %v155
    %v963 = vpop.f32.mrf.mxu0
    %v964 = vadd.f32 %v875, %v963
    %v965 = vpop.f32.mrf.mxu0
    %v966 = vadd.f32 %v877, %v965
    %967 = vmatmul.bf16.gmra.mxu0 %v158
    %v968 = vpop.f32.mrf.mxu0
    %v969 = vadd.f32 %v880, %v968
    %v970 = vpop.f32.mrf.mxu0
    %v971 = vadd.f32 %v882, %v970
    %972 = vmatmul.bf16.gmra.mxu0 %v161
    %v973 = vpop.f32.mrf.mxu0
    %v974 = vadd.f32 %v885, %v973
    %v975 = vpop.f32.mrf.mxu0
    %v976 = vadd.f32 %v887, %v975
    %977 = vmatmul.bf16.gmra.mxu0 %v164
    %v978 = vpop.f32.mrf.mxu0
    %v979 = vadd.f32 %v890, %v978
    %v980 = vpop.f32.mrf.mxu0
    %v981 = vadd.f32 %v892, %v980
    %982 = vmatmul.bf16.gmra.mxu0 %v167
    %v983 = vpop.f32.mrf.mxu0
    %v984 = vadd.f32 %v895, %v983
    %v985 = vpop.f32.mrf.mxu0
    %v986 = vadd.f32 %v897, %v985
    %987 = vmatmul.bf16.gmra.mxu0 %v170
    %v988 = vpop.f32.mrf.mxu0
    %v989 = vadd.f32 %v900, %v988
    %v990 = vpop.f32.mrf.mxu0
    %v991 = vadd.f32 %v902, %v990
    %992 = vdwg.mxu0
    %v993 = vpack.c.bf16 %v647, %v647
    %v994 = vpack.c.bf16 %v649, %v649
    %v995 = vpack.c.bf16 %v652, %v652
    %v996 = vpack.c.bf16 %v654, %v654
    %v997 = vpack.c.bf16 %v657, %v657
    %v998 = vpack.c.bf16 %v659, %v659
    %v999 = vpack.c.bf16 %v662, %v662
    %v1000 = vpack.c.bf16 %v664, %v664
    %v1001 = vpack.c.bf16 %v667, %v667
    %v1002 = vpack.c.bf16 %v669, %v669
    %v1003 = vpack.c.bf16 %v672, %v672
    %v1004 = vpack.c.bf16 %v674, %v674
    %v1005 = vpack.c.bf16 %v677, %v677
    %v1006 = vpack.c.bf16 %v679, %v679
    %v1007 = vpack.c.bf16 %v682, %v682
    %v1008 = vpack.c.bf16 %v684, %v684
    %v1009 = vpack.c.bf16 %v687, %v687
    %v1010 = vpack.c.bf16 %v689, %v689
    %v1011 = vpack.c.bf16 %v692, %v692
    %v1012 = vpack.c.bf16 %v694, %v694
    %v1013 = vpack.c.bf16 %v697, %v697
    %v1014 = vpack.c.bf16 %v699, %v699
    %v1015 = vpack.c.bf16 %v702, %v702
    %v1016 = vpack.c.bf16 %v704, %v704
    %v1017 = vpack.c.bf16 %v707, %v707
    %v1018 = vpack.c.bf16 %v709, %v709
    %v1019 = vpack.c.bf16 %v712, %v712
    %v1020 = vpack.c.bf16 %v714, %v714
    %v1021 = vpack.c.bf16 %v717, %v717
    %v1022 = vpack.c.bf16 %v719, %v719
    %v1023 = vpack.c.bf16 %v722, %v722
    %v1024 = vpack.c.bf16 %v724, %v724
    %v1025 = vpack.c.bf16 %v914, %v914
    %v1026 = vpack.c.bf16 %v916, %v916
    %v1027 = vpack.c.bf16 %v919, %v919
    %v1028 = vpack.c.bf16 %v921, %v921
    %v1029 = vpack.c.bf16 %v924, %v924
    %v1030 = vpack.c.bf16 %v926, %v926
    %v1031 = vpack.c.bf16 %v929, %v929
    %v1032 = vpack.c.bf16 %v931, %v931
    %v1033 = vpack.c.bf16 %v934, %v934
    %v1034 = vpack.c.bf16 %v936, %v936
    %v1035 = vpack.c.bf16 %v939, %v939
    %v1036 = vpack.c.bf16 %v941, %v941
    %v1037 = vpack.c.bf16 %v944, %v944
    %v1038 = vpack.c.bf16 %v946, %v946
    %v1039 = vpack.c.bf16 %v949, %v949
    %v1040 = vpack.c.bf16 %v951, %v951
    %v1041 = vpack.c.bf16 %v954, %v954
    %v1042 = vpack.c.bf16 %v956, %v956
    %v1043 = vpack.c.bf16 %v959, %v959
    %v1044 = vpack.c.bf16 %v961, %v961
    %v1045 = vpack.c.bf16 %v964, %v964
    %v1046 = vpack.c.bf16 %v966, %v966
    %v1047 = vpack.c.bf16 %v969, %v969
    %v1048 = vpack.c.bf16 %v971, %v971
    %v1049 = vpack.c.bf16 %v974, %v974
    %v1050 = vpack.c.bf16 %v976, %v976
    %v1051 = vpack.c.bf16 %v979, %v979
    %v1052 = vpack.c.bf16 %v981, %v981
    %v1053 = vpack.c.bf16 %v984, %v984
    %v1054 = vpack.c.bf16 %v986, %v986
    %v1055 = vpack.c.bf16 %v989, %v989
    %v1056 = vpack.c.bf16 %v991, %v991
    %v1057 = vlaneseq
    %v1058 = vshrl.u32 %v1057, 7
    %v1059 = vadd.s32 %v1058, 8
    %v1060 = vadd.s32 %v1058, 16
    %v1061 = vadd.s32 %v1058, 24
    %v1062 = vadd.s32 %v1058, 32
    %v1063 = vadd.s32 %v1058, 40
    %v1064 = vadd.s32 %v1058, 48
    %v1065 = vadd.s32 %v1058, 56
    %v1066 = vadd.s32 %v1058, 64
    %v1067 = vadd.s32 %v1058, 72
    %v1068 = vadd.s32 %v1058, 80
    %v1069 = vadd.s32 %v1058, 88
    %v1070 = vadd.s32 %v1058, 96
    %v1071 = vadd.s32 %v1058, 104
    %v1072 = vadd.s32 %v1058, 112
    %v1073 = vadd.s32 %v1058, 120
    %v1074 = vlaneseq
    %v1075 = vand.u32 %v1074, 127
    %vm1076 = vcmp.le.s32.totalorder %v1075, %v1058
    %vm1077 = vcmp.le.s32.totalorder %v1075, %v1059
    %vm1078 = vcmp.le.s32.totalorder %v1075, %v1060
    %vm1079 = vcmp.le.s32.totalorder %v1075, %v1061
    %vm1080 = vcmp.le.s32.totalorder %v1075, %v1062
    %vm1081 = vcmp.le.s32.totalorder %v1075, %v1063
    %vm1082 = vcmp.le.s32.totalorder %v1075, %v1064
    %vm1083 = vcmp.le.s32.totalorder %v1075, %v1065
    %vm1084 = vcmp.le.s32.totalorder %v1075, %v1066
    %vm1085 = vcmp.le.s32.totalorder %v1075, %v1067
    %vm1086 = vcmp.le.s32.totalorder %v1075, %v1068
    %vm1087 = vcmp.le.s32.totalorder %v1075, %v1069
    %vm1088 = vcmp.le.s32.totalorder %v1075, %v1070
    %vm1089 = vcmp.le.s32.totalorder %v1075, %v1071
    %vm1090 = vcmp.le.s32.totalorder %v1075, %v1072
    %vm1091 = vcmp.le.s32.totalorder %v1075, %v1073
    %v1108 = vunpack.c.l.b16 %v993
    %v1109 = vunpack.c.l.b16 %v994
    %v1110 = vunpack.c.l.b16 %v995
    %v1111 = vunpack.c.l.b16 %v996
    %v1112 = vunpack.c.l.b16 %v997
    %v1113 = vunpack.c.l.b16 %v998
    %v1114 = vunpack.c.l.b16 %v999
    %v1115 = vunpack.c.l.b16 %v1000
    %v1116 = vunpack.c.l.b16 %v1001
    %v1117 = vunpack.c.l.b16 %v1002
    %v1118 = vunpack.c.l.b16 %v1003
    %v1119 = vunpack.c.l.b16 %v1004
    %v1120 = vunpack.c.l.b16 %v1005
    %v1121 = vunpack.c.l.b16 %v1006
    %v1122 = vunpack.c.l.b16 %v1007
    %v1123 = vunpack.c.l.b16 %v1008
    %v1124 = vpack.c.b16 %v1109, %v1108
    %v1125 = vpack.c.b16 %v1111, %v1110
    %v1126 = vpack.c.b16 %v1113, %v1112
    %v1127 = vpack.c.b16 %v1115, %v1114
    %v1128 = vpack.c.b16 %v1117, %v1116
    %v1129 = vpack.c.b16 %v1119, %v1118
    %v1130 = vpack.c.b16 %v1121, %v1120
    %v1131 = vpack.c.b16 %v1123, %v1122
    %1132 = vrot.lane.b32.xlu0 %v1124, 64
    %v1133 = vpop.permute.xlu0 %1132
    %1134 = vrot.lane.b32.xlu0 %v1125, 64
    %v1135 = vpop.permute.xlu0 %1134
    %1136 = vrot.lane.b32.xlu0 %v1126, 64
    %v1137 = vpop.permute.xlu0 %1136
    %1138 = vrot.lane.b32.xlu0 %v1127, 64
    %v1139 = vpop.permute.xlu0 %1138
    %1140 = vrot.lane.b32.xlu0 %v1128, 64
    %v1141 = vpop.permute.xlu0 %1140
    %1142 = vrot.lane.b32.xlu0 %v1129, 64
    %v1143 = vpop.permute.xlu0 %1142
    %1144 = vrot.lane.b32.xlu0 %v1130, 64
    %v1145 = vpop.permute.xlu0 %1144
    %1146 = vrot.lane.b32.xlu0 %v1131, 64
    %v1147 = vpop.permute.xlu0 %1146
    %vm1148 = vcmask 523264
    %v1150 = vsel %vm1148, %v1133, 0
    %v1153 = vsel %vm1148, %v1135, 0
    %v1156 = vsel %vm1148, %v1137, 0
    %v1159 = vsel %vm1148, %v1139, 0
    %v1162 = vsel %vm1148, %v1141, 0
    %v1165 = vsel %vm1148, %v1143, 0
    %v1168 = vsel %vm1148, %v1145, 0
    %v1171 = vsel %vm1148, %v1147, 0
    %v1174 = vsel %vm1148, %v1124, 0
    %v1177 = vsel %vm1148, %v1125, 0
    %v1180 = vsel %vm1148, %v1126, 0
    %v1183 = vsel %vm1148, %v1127, 0
    %v1186 = vsel %vm1148, %v1128, 0
    %v1189 = vsel %vm1148, %v1129, 0
    %v1192 = vsel %vm1148, %v1130, 0
    %v1195 = vsel %vm1148, %v1131, 0
    %1197 = vmatpush.bf16.xpose.msra.mxu0 %v1195
    %1198 = vmatpush.bf16.xpose.msra.mxu0 %v1192
    %1199 = vmatpush.bf16.xpose.msra.mxu0 %v1189
    %1200 = vmatpush.bf16.xpose.msra.mxu0 %v1186
    %1201 = vmatpush.bf16.xpose.msra.mxu0 %v1183
    %1202 = vmatpush.bf16.xpose.msra.mxu0 %v1180
    %1203 = vmatpush.bf16.xpose.msra.mxu0 %v1177
    %1204 = vmatpush.bf16.xpose.msra.mxu0 %v1174
    %1205 = vmatmul.bf16.gmra.mxu0 %v1150
    %v1206 = vpop.f32.mrf.mxu0
    %v1207 = vadd.f32 0.0, %v1206
    %v1208 = vpop.f32.mrf.mxu0
    %v1209 = vadd.f32 0.0, %v1208
    %1210 = vmatmul.bf16.gmra.mxu0 %v1153
    %v1211 = vpop.f32.mrf.mxu0
    %v1212 = vadd.f32 0.0, %v1211
    %v1213 = vpop.f32.mrf.mxu0
    %v1214 = vadd.f32 0.0, %v1213
    %1215 = vmatmul.bf16.gmra.mxu0 %v1156
    %v1216 = vpop.f32.mrf.mxu0
    %v1217 = vadd.f32 0.0, %v1216
    %v1218 = vpop.f32.mrf.mxu0
    %v1219 = vadd.f32 0.0, %v1218
    %1220 = vmatmul.bf16.gmra.mxu0 %v1159
    %v1221 = vpop.f32.mrf.mxu0
    %v1222 = vadd.f32 0.0, %v1221
    %v1223 = vpop.f32.mrf.mxu0
    %v1224 = vadd.f32 0.0, %v1223
    %1225 = vmatmul.bf16.gmra.mxu0 %v1162
    %v1226 = vpop.f32.mrf.mxu0
    %v1227 = vadd.f32 0.0, %v1226
    %v1228 = vpop.f32.mrf.mxu0
    %v1229 = vadd.f32 0.0, %v1228
    %1230 = vmatmul.bf16.gmra.mxu0 %v1165
    %v1231 = vpop.f32.mrf.mxu0
    %v1232 = vadd.f32 0.0, %v1231
    %v1233 = vpop.f32.mrf.mxu0
    %v1234 = vadd.f32 0.0, %v1233
    %1235 = vmatmul.bf16.gmra.mxu0 %v1168
    %v1236 = vpop.f32.mrf.mxu0
    %v1237 = vadd.f32 0.0, %v1236
    %v1238 = vpop.f32.mrf.mxu0
    %v1239 = vadd.f32 0.0, %v1238
    %1240 = vmatmul.bf16.gmra.mxu0 %v1171
    %v1241 = vpop.f32.mrf.mxu0
    %v1242 = vadd.f32 0.0, %v1241
    %v1243 = vpop.f32.mrf.mxu0
    %v1244 = vadd.f32 0.0, %v1243
    %1245 = vdwg.mxu0
    %v1246 = vsel %vm1076, %v1207, -1e+30
    %v1247 = vsel %vm1077, %v1209, -1e+30
    %v1248 = vsel %vm1078, %v1212, -1e+30
    %v1249 = vsel %vm1079, %v1214, -1e+30
    %v1250 = vsel %vm1080, %v1217, -1e+30
    %v1251 = vsel %vm1081, %v1219, -1e+30
    %v1252 = vsel %vm1082, %v1222, -1e+30
    %v1253 = vsel %vm1083, %v1224, -1e+30
    %v1254 = vsel %vm1084, %v1227, -1e+30
    %v1255 = vsel %vm1085, %v1229, -1e+30
    %v1256 = vsel %vm1086, %v1232, -1e+30
    %v1257 = vsel %vm1087, %v1234, -1e+30
    %v1258 = vsel %vm1088, %v1237, -1e+30
    %v1259 = vsel %vm1089, %v1239, -1e+30
    %v1260 = vsel %vm1090, %v1242, -1e+30
    %v1261 = vsel %vm1091, %v1244, -1e+30
    %1262 = vmax.xlane.f32.xlu0 %v1246
    %v1263 = vpop.xlane.xlu0 %1262
    %1264 = vmax.xlane.f32.xlu0 %v1247
    %v1265 = vpop.xlane.xlu0 %1264
    %1266 = vmax.xlane.f32.xlu0 %v1248
    %v1267 = vpop.xlane.xlu0 %1266
    %1268 = vmax.xlane.f32.xlu0 %v1249
    %v1269 = vpop.xlane.xlu0 %1268
    %1270 = vmax.xlane.f32.xlu0 %v1250
    %v1271 = vpop.xlane.xlu0 %1270
    %1272 = vmax.xlane.f32.xlu0 %v1251
    %v1273 = vpop.xlane.xlu0 %1272
    %1274 = vmax.xlane.f32.xlu0 %v1252
    %v1275 = vpop.xlane.xlu0 %1274
    %1276 = vmax.xlane.f32.xlu0 %v1253
    %v1277 = vpop.xlane.xlu0 %1276
    %1278 = vmax.xlane.f32.xlu0 %v1254
    %v1279 = vpop.xlane.xlu0 %1278
    %1280 = vmax.xlane.f32.xlu0 %v1255
    %v1281 = vpop.xlane.xlu0 %1280
    %1282 = vmax.xlane.f32.xlu0 %v1256
    %v1283 = vpop.xlane.xlu0 %1282
    %1284 = vmax.xlane.f32.xlu0 %v1257
    %v1285 = vpop.xlane.xlu0 %1284
    %1286 = vmax.xlane.f32.xlu0 %v1258
    %v1287 = vpop.xlane.xlu0 %1286
    %1288 = vmax.xlane.f32.xlu0 %v1259
    %v1289 = vpop.xlane.xlu0 %1288
    %1290 = vmax.xlane.f32.xlu0 %v1260
    %v1291 = vpop.xlane.xlu0 %1290
    %1292 = vmax.xlane.f32.xlu0 %v1261
    %v1293 = vpop.xlane.xlu0 %1292
    %v1294 = vsub.f32 %v1246, %v1263
    %v1295 = vsub.f32 %v1247, %v1265
    %v1296 = vsub.f32 %v1248, %v1267
    %v1297 = vsub.f32 %v1249, %v1269
    %v1298 = vsub.f32 %v1250, %v1271
    %v1299 = vsub.f32 %v1251, %v1273
    %v1300 = vsub.f32 %v1252, %v1275
    %v1301 = vsub.f32 %v1253, %v1277
    %v1302 = vsub.f32 %v1254, %v1279
    %v1303 = vsub.f32 %v1255, %v1281
    %v1304 = vsub.f32 %v1256, %v1283
    %v1305 = vsub.f32 %v1257, %v1285
    %v1306 = vsub.f32 %v1258, %v1287
    %v1307 = vsub.f32 %v1259, %v1289
    %v1308 = vsub.f32 %v1260, %v1291
    %v1309 = vsub.f32 %v1261, %v1293
    %v1310 = vpack.c.bf16 %v1295, %v1294
    %v1311 = vpack.c.bf16 %v1297, %v1296
    %v1312 = vpack.c.bf16 %v1299, %v1298
    %v1313 = vpack.c.bf16 %v1301, %v1300
    %v1314 = vpack.c.bf16 %v1303, %v1302
    %v1315 = vpack.c.bf16 %v1305, %v1304
    %v1316 = vpack.c.bf16 %v1307, %v1306
    %v1317 = vpack.c.bf16 %v1309, %v1308
    %v1318 = vunpack.c.l.bf16 %v1310
    %v1319 = vunpack.c.h.bf16 %v1310
    %v1320 = vunpack.c.l.bf16 %v1311
    %v1321 = vunpack.c.h.bf16 %v1311
    %v1322 = vunpack.c.l.bf16 %v1312
    %v1323 = vunpack.c.h.bf16 %v1312
    %v1324 = vunpack.c.l.bf16 %v1313
    %v1325 = vunpack.c.h.bf16 %v1313
    %v1326 = vunpack.c.l.bf16 %v1314
    %v1327 = vunpack.c.h.bf16 %v1314
    %v1328 = vunpack.c.l.bf16 %v1315
    %v1329 = vunpack.c.h.bf16 %v1315
    %v1330 = vunpack.c.l.bf16 %v1316
    %v1331 = vunpack.c.h.bf16 %v1316
    %v1332 = vunpack.c.l.bf16 %v1317
    %v1333 = vunpack.c.h.bf16 %v1317
    %v1334 = vmul.f32 %v1318, 1.442695
    %v1335 = vpow.pop %v1334
    %v1336 = vmul.f32 %v1319, 1.442695
    %v1337 = vpow.pop %v1336
    %v1338 = vmul.f32 %v1320, 1.442695
    %v1339 = vpow.pop %v1338
    %v1340 = vmul.f32 %v1321, 1.442695
    %v1341 = vpow.pop %v1340
    %v1342 = vmul.f32 %v1322, 1.442695
    %v1343 = vpow.pop %v1342
    %v1344 = vmul.f32 %v1323, 1.442695
    %v1345 = vpow.pop %v1344
    %v1346 = vmul.f32 %v1324, 1.442695
    %v1347 = vpow.pop %v1346
    %v1348 = vmul.f32 %v1325, 1.442695
    %v1349 = vpow.pop %v1348
    %v1350 = vmul.f32 %v1326, 1.442695
    %v1351 = vpow.pop %v1350
    %v1352 = vmul.f32 %v1327, 1.442695
    %v1353 = vpow.pop %v1352
    %v1354 = vmul.f32 %v1328, 1.442695
    %v1355 = vpow.pop %v1354
    %v1356 = vmul.f32 %v1329, 1.442695
    %v1357 = vpow.pop %v1356
    %v1358 = vmul.f32 %v1330, 1.442695
    %v1359 = vpow.pop %v1358
    %v1360 = vmul.f32 %v1331, 1.442695
    %v1361 = vpow.pop %v1360
    %v1362 = vmul.f32 %v1332, 1.442695
    %v1363 = vpow.pop %v1362
    %v1364 = vmul.f32 %v1333, 1.442695
    %v1365 = vpow.pop %v1364
    %v1366 = vpack.c.bf16 %v1337, %v1335
    %v1367 = vpack.c.bf16 %v1341, %v1339
    %v1368 = vpack.c.bf16 %v1345, %v1343
    %v1369 = vpack.c.bf16 %v1349, %v1347
    %v1370 = vpack.c.bf16 %v1353, %v1351
    %v1371 = vpack.c.bf16 %v1357, %v1355
    %v1372 = vpack.c.bf16 %v1361, %v1359
    %v1373 = vpack.c.bf16 %v1365, %v1363
    %v1374 = vunpack.c.l.bf16 %v1366
    %v1375 = vunpack.c.h.bf16 %v1366
    %v1376 = vunpack.c.l.bf16 %v1367
    %v1377 = vunpack.c.h.bf16 %v1367
    %v1378 = vunpack.c.l.bf16 %v1368
    %v1379 = vunpack.c.h.bf16 %v1368
    %v1380 = vunpack.c.l.bf16 %v1369
    %v1381 = vunpack.c.h.bf16 %v1369
    %v1382 = vunpack.c.l.bf16 %v1370
    %v1383 = vunpack.c.h.bf16 %v1370
    %v1384 = vunpack.c.l.bf16 %v1371
    %v1385 = vunpack.c.h.bf16 %v1371
    %v1386 = vunpack.c.l.bf16 %v1372
    %v1387 = vunpack.c.h.bf16 %v1372
    %v1388 = vunpack.c.l.bf16 %v1373
    %v1389 = vunpack.c.h.bf16 %v1373
    %1390 = vadd.xlane.f32.xlu0 %v1374
    %v1391 = vpop.xlane.xlu0 %1390
    %1392 = vadd.xlane.f32.xlu0 %v1375
    %v1393 = vpop.xlane.xlu0 %1392
    %1394 = vadd.xlane.f32.xlu0 %v1376
    %v1395 = vpop.xlane.xlu0 %1394
    %1396 = vadd.xlane.f32.xlu0 %v1377
    %v1397 = vpop.xlane.xlu0 %1396
    %1398 = vadd.xlane.f32.xlu0 %v1378
    %v1399 = vpop.xlane.xlu0 %1398
    %1400 = vadd.xlane.f32.xlu0 %v1379
    %v1401 = vpop.xlane.xlu0 %1400
    %1402 = vadd.xlane.f32.xlu0 %v1380
    %v1403 = vpop.xlane.xlu0 %1402
    %1404 = vadd.xlane.f32.xlu0 %v1381
    %v1405 = vpop.xlane.xlu0 %1404
    %1406 = vadd.xlane.f32.xlu0 %v1382
    %v1407 = vpop.xlane.xlu0 %1406
    %1408 = vadd.xlane.f32.xlu0 %v1383
    %v1409 = vpop.xlane.xlu0 %1408
    %1410 = vadd.xlane.f32.xlu0 %v1384
    %v1411 = vpop.xlane.xlu0 %1410
    %1412 = vadd.xlane.f32.xlu0 %v1385
    %v1413 = vpop.xlane.xlu0 %1412
    %1414 = vadd.xlane.f32.xlu0 %v1386
    %v1415 = vpop.xlane.xlu0 %1414
    %1416 = vadd.xlane.f32.xlu0 %v1387
    %v1417 = vpop.xlane.xlu0 %1416
    %1418 = vadd.xlane.f32.xlu0 %v1388
    %v1419 = vpop.xlane.xlu0 %1418
    %1420 = vadd.xlane.f32.xlu0 %v1389
    %v1421 = vpop.xlane.xlu0 %1420
    %v1438 = vunpack.c.l.b16 %v1025
    %v1439 = vunpack.c.l.b16 %v1026
    %v1440 = vunpack.c.l.b16 %v1027
    %v1441 = vunpack.c.l.b16 %v1028
    %v1442 = vunpack.c.l.b16 %v1029
    %v1443 = vunpack.c.l.b16 %v1030
    %v1444 = vunpack.c.l.b16 %v1031
    %v1445 = vunpack.c.l.b16 %v1032
    %v1446 = vunpack.c.l.b16 %v1033
    %v1447 = vunpack.c.l.b16 %v1034
    %v1448 = vunpack.c.l.b16 %v1035
    %v1449 = vunpack.c.l.b16 %v1036
    %v1450 = vunpack.c.l.b16 %v1037
    %v1451 = vunpack.c.l.b16 %v1038
    %v1452 = vunpack.c.l.b16 %v1039
    %v1453 = vunpack.c.l.b16 %v1040
    %v1454 = vpack.c.b16 %v1439, %v1438
    %v1455 = vpack.c.b16 %v1441, %v1440
    %v1456 = vpack.c.b16 %v1443, %v1442
    %v1457 = vpack.c.b16 %v1445, %v1444
    %v1458 = vpack.c.b16 %v1447, %v1446
    %v1459 = vpack.c.b16 %v1449, %v1448
    %v1460 = vpack.c.b16 %v1451, %v1450
    %v1461 = vpack.c.b16 %v1453, %v1452
    %1470 = vmatpush.bf16.msra.mxu0 %v1461
    %1471 = vmatpush.bf16.msra.mxu0 %v1460
    %1472 = vmatpush.bf16.msra.mxu0 %v1459
    %1473 = vmatpush.bf16.msra.mxu0 %v1458
    %1474 = vmatpush.bf16.msra.mxu0 %v1457
    %1475 = vmatpush.bf16.msra.mxu0 %v1456
    %1476 = vmatpush.bf16.msra.mxu0 %v1455
    %1477 = vmatpush.bf16.msra.mxu0 %v1454
    %1478 = vmatmul.bf16.gmra.mxu0 %v1366
    %v1479 = vpop.f32.mrf.mxu0
    %v1480 = vadd.f32 0.0, %v1479
    %v1481 = vpop.f32.mrf.mxu0
    %v1482 = vadd.f32 0.0, %v1481
    %1483 = vmatmul.bf16.gmra.mxu0 %v1367
    %v1484 = vpop.f32.mrf.mxu0
    %v1485 = vadd.f32 0.0, %v1484
    %v1486 = vpop.f32.mrf.mxu0
    %v1487 = vadd.f32 0.0, %v1486
    %1488 = vmatmul.bf16.gmra.mxu0 %v1368
    %v1489 = vpop.f32.mrf.mxu0
    %v1490 = vadd.f32 0.0, %v1489
    %v1491 = vpop.f32.mrf.mxu0
    %v1492 = vadd.f32 0.0, %v1491
    %1493 = vmatmul.bf16.gmra.mxu0 %v1369
    %v1494 = vpop.f32.mrf.mxu0
    %v1495 = vadd.f32 0.0, %v1494
    %v1496 = vpop.f32.mrf.mxu0
    %v1497 = vadd.f32 0.0, %v1496
    %1498 = vmatmul.bf16.gmra.mxu0 %v1370
    %v1499 = vpop.f32.mrf.mxu0
    %v1500 = vadd.f32 0.0, %v1499
    %v1501 = vpop.f32.mrf.mxu0
    %v1502 = vadd.f32 0.0, %v1501
    %1503 = vmatmul.bf16.gmra.mxu0 %v1371
    %v1504 = vpop.f32.mrf.mxu0
    %v1505 = vadd.f32 0.0, %v1504
    %v1506 = vpop.f32.mrf.mxu0
    %v1507 = vadd.f32 0.0, %v1506
    %1508 = vmatmul.bf16.gmra.mxu0 %v1372
    %v1509 = vpop.f32.mrf.mxu0
    %v1510 = vadd.f32 0.0, %v1509
    %v1511 = vpop.f32.mrf.mxu0
    %v1512 = vadd.f32 0.0, %v1511
    %1513 = vmatmul.bf16.gmra.mxu0 %v1373
    %v1514 = vpop.f32.mrf.mxu0
    %v1515 = vadd.f32 0.0, %v1514
    %v1516 = vpop.f32.mrf.mxu0
    %v1517 = vadd.f32 0.0, %v1516
    %1518 = vdwg.mxu0
    %v1519 = vrcp.pop %v1391
    %v1520 = vrcp.pop %v1393
    %v1521 = vrcp.pop %v1395
    %v1522 = vrcp.pop %v1397
    %v1523 = vrcp.pop %v1399
    %v1524 = vrcp.pop %v1401
    %v1525 = vrcp.pop %v1403
    %v1526 = vrcp.pop %v1405
    %v1527 = vrcp.pop %v1407
    %v1528 = vrcp.pop %v1409
    %v1529 = vrcp.pop %v1411
    %v1530 = vrcp.pop %v1413
    %v1531 = vrcp.pop %v1415
    %v1532 = vrcp.pop %v1417
    %v1533 = vrcp.pop %v1419
    %v1534 = vrcp.pop %v1421
    %v1535 = vmul.f32 %v1480, %v1519
    %v1536 = vmul.f32 %v1482, %v1520
    %v1537 = vmul.f32 %v1485, %v1521
    %v1538 = vmul.f32 %v1487, %v1522
    %v1539 = vmul.f32 %v1490, %v1523
    %v1540 = vmul.f32 %v1492, %v1524
    %v1541 = vmul.f32 %v1495, %v1525
    %v1542 = vmul.f32 %v1497, %v1526
    %v1543 = vmul.f32 %v1500, %v1527
    %v1544 = vmul.f32 %v1502, %v1528
    %v1545 = vmul.f32 %v1505, %v1529
    %v1546 = vmul.f32 %v1507, %v1530
    %v1547 = vmul.f32 %v1510, %v1531
    %v1548 = vmul.f32 %v1512, %v1532
    %v1549 = vmul.f32 %v1515, %v1533
    %v1550 = vmul.f32 %v1517, %v1534
    %1551 = vst.msk [vmem:[%s2] sm:$0xff] %vm1148, %v1535
    %1552 = vst.msk [vmem:[%s2 + $0x8] sm:$0xff] %vm1148, %v1536
    %1553 = vst.msk [vmem:[%s2 + $0x10] sm:$0xff] %vm1148, %v1537
    %1554 = vst.msk [vmem:[%s2 + $0x18] sm:$0xff] %vm1148, %v1538
    %1555 = vst.msk [vmem:[%s2 + $0x20] sm:$0xff] %vm1148, %v1539
    %1556 = vst.msk [vmem:[%s2 + $0x28] sm:$0xff] %vm1148, %v1540
    %1557 = vst.msk [vmem:[%s2 + $0x30] sm:$0xff] %vm1148, %v1541
    %1558 = vst.msk [vmem:[%s2 + $0x38] sm:$0xff] %vm1148, %v1542
    %1559 = vst.msk [vmem:[%s2 + $0x40] sm:$0xff] %vm1148, %v1543
    %1560 = vst.msk [vmem:[%s2 + $0x48] sm:$0xff] %vm1148, %v1544
    %1561 = vst.msk [vmem:[%s2 + $0x50] sm:$0xff] %vm1148, %v1545
    %1562 = vst.msk [vmem:[%s2 + $0x58] sm:$0xff] %vm1148, %v1546
    %1563 = vst.msk [vmem:[%s2 + $0x60] sm:$0xff] %vm1148, %v1547
    %1564 = vst.msk [vmem:[%s2 + $0x68] sm:$0xff] %vm1148, %v1548
    %1565 = vst.msk [vmem:[%s2 + $0x70] sm:$0xff] %vm1148, %v1549
    %1566 = vst.msk [vmem:[%s2 + $0x78] sm:$0xff] %vm1148, %v1550
    %v1583 = vunpack.c.l.b16 %v1009
    %v1584 = vunpack.c.l.b16 %v1010
    %v1585 = vunpack.c.l.b16 %v1011
    %v1586 = vunpack.c.l.b16 %v1012
    %v1587 = vunpack.c.l.b16 %v1013
    %v1588 = vunpack.c.l.b16 %v1014
    %v1589 = vunpack.c.l.b16 %v1015
    %v1590 = vunpack.c.l.b16 %v1016
    %v1591 = vunpack.c.l.b16 %v1017
    %v1592 = vunpack.c.l.b16 %v1018
    %v1593 = vunpack.c.l.b16 %v1019
    %v1594 = vunpack.c.l.b16 %v1020
    %v1595 = vunpack.c.l.b16 %v1021
    %v1596 = vunpack.c.l.b16 %v1022
    %v1597 = vunpack.c.l.b16 %v1023
    %v1598 = vunpack.c.l.b16 %v1024
    %v1599 = vpack.c.b16 %v1584, %v1583
    %v1600 = vpack.c.b16 %v1586, %v1585
    %v1601 = vpack.c.b16 %v1588, %v1587
    %v1602 = vpack.c.b16 %v1590, %v1589
    %v1603 = vpack.c.b16 %v1592, %v1591
    %v1604 = vpack.c.b16 %v1594, %v1593
    %v1605 = vpack.c.b16 %v1596, %v1595
    %v1606 = vpack.c.b16 %v1598, %v1597
    %1607 = vrot.lane.b32.xlu0 %v1599, 64
    %v1608 = vpop.permute.xlu0 %1607
    %1609 = vrot.lane.b32.xlu0 %v1600, 64
    %v1610 = vpop.permute.xlu0 %1609
    %1611 = vrot.lane.b32.xlu0 %v1601, 64
    %v1612 = vpop.permute.xlu0 %1611
    %1613 = vrot.lane.b32.xlu0 %v1602, 64
    %v1614 = vpop.permute.xlu0 %1613
    %1615 = vrot.lane.b32.xlu0 %v1603, 64
    %v1616 = vpop.permute.xlu0 %1615
    %1617 = vrot.lane.b32.xlu0 %v1604, 64
    %v1618 = vpop.permute.xlu0 %1617
    %1619 = vrot.lane.b32.xlu0 %v1605, 64
    %v1620 = vpop.permute.xlu0 %1619
    %1621 = vrot.lane.b32.xlu0 %v1606, 64
    %v1622 = vpop.permute.xlu0 %1621
    %v1624 = vsel %vm1148, %v1608, 0
    %v1627 = vsel %vm1148, %v1610, 0
    %v1630 = vsel %vm1148, %v1612, 0
    %v1633 = vsel %vm1148, %v1614, 0
    %v1636 = vsel %vm1148, %v1616, 0
    %v1639 = vsel %vm1148, %v1618, 0
    %v1642 = vsel %vm1148, %v1620, 0
    %v1645 = vsel %vm1148, %v1622, 0
    %v1648 = vsel %vm1148, %v1599, 0
    %v1651 = vsel %vm1148, %v1600, 0
    %v1654 = vsel %vm1148, %v1601, 0
    %v1657 = vsel %vm1148, %v1602, 0
    %v1660 = vsel %vm1148, %v1603, 0
    %v1663 = vsel %vm1148, %v1604, 0
    %v1666 = vsel %vm1148, %v1605, 0
    %v1669 = vsel %vm1148, %v1606, 0
    %1671 = vmatpush.bf16.xpose.msra.mxu0 %v1669
    %1672 = vmatpush.bf16.xpose.msra.mxu0 %v1666
    %1673 = vmatpush.bf16.xpose.msra.mxu0 %v1663
    %1674 = vmatpush.bf16.xpose.msra.mxu0 %v1660
    %1675 = vmatpush.bf16.xpose.msra.mxu0 %v1657
    %1676 = vmatpush.bf16.xpose.msra.mxu0 %v1654
    %1677 = vmatpush.bf16.xpose.msra.mxu0 %v1651
    %1678 = vmatpush.bf16.xpose.msra.mxu0 %v1648
    %1679 = vmatmul.bf16.gmra.mxu0 %v1624
    %v1680 = vpop.f32.mrf.mxu0
    %v1681 = vadd.f32 0.0, %v1680
    %v1682 = vpop.f32.mrf.mxu0
    %v1683 = vadd.f32 0.0, %v1682
    %1684 = vmatmul.bf16.gmra.mxu0 %v1627
    %v1685 = vpop.f32.mrf.mxu0
    %v1686 = vadd.f32 0.0, %v1685
    %v1687 = vpop.f32.mrf.mxu0
    %v1688 = vadd.f32 0.0, %v1687
    %1689 = vmatmul.bf16.gmra.mxu0 %v1630
    %v1690 = vpop.f32.mrf.mxu0
    %v1691 = vadd.f32 0.0, %v1690
    %v1692 = vpop.f32.mrf.mxu0
    %v1693 = vadd.f32 0.0, %v1692
    %1694 = vmatmul.bf16.gmra.mxu0 %v1633
    %v1695 = vpop.f32.mrf.mxu0
    %v1696 = vadd.f32 0.0, %v1695
    %v1697 = vpop.f32.mrf.mxu0
    %v1698 = vadd.f32 0.0, %v1697
    %1699 = vmatmul.bf16.gmra.mxu0 %v1636
    %v1700 = vpop.f32.mrf.mxu0
    %v1701 = vadd.f32 0.0, %v1700
    %v1702 = vpop.f32.mrf.mxu0
    %v1703 = vadd.f32 0.0, %v1702
    %1704 = vmatmul.bf16.gmra.mxu0 %v1639
    %v1705 = vpop.f32.mrf.mxu0
    %v1706 = vadd.f32 0.0, %v1705
    %v1707 = vpop.f32.mrf.mxu0
    %v1708 = vadd.f32 0.0, %v1707
    %1709 = vmatmul.bf16.gmra.mxu0 %v1642
    %v1710 = vpop.f32.mrf.mxu0
    %v1711 = vadd.f32 0.0, %v1710
    %v1712 = vpop.f32.mrf.mxu0
    %v1713 = vadd.f32 0.0, %v1712
    %1714 = vmatmul.bf16.gmra.mxu0 %v1645
    %v1715 = vpop.f32.mrf.mxu0
    %v1716 = vadd.f32 0.0, %v1715
    %v1717 = vpop.f32.mrf.mxu0
    %v1718 = vadd.f32 0.0, %v1717
    %1719 = vdwg.mxu0
    %v1720 = vsel %vm1076, %v1681, -1e+30
    %v1721 = vsel %vm1077, %v1683, -1e+30
    %v1722 = vsel %vm1078, %v1686, -1e+30
    %v1723 = vsel %vm1079, %v1688, -1e+30
    %v1724 = vsel %vm1080, %v1691, -1e+30
    %v1725 = vsel %vm1081, %v1693, -1e+30
    %v1726 = vsel %vm1082, %v1696, -1e+30
    %v1727 = vsel %vm1083, %v1698, -1e+30
    %v1728 = vsel %vm1084, %v1701, -1e+30
    %v1729 = vsel %vm1085, %v1703, -1e+30
    %v1730 = vsel %vm1086, %v1706, -1e+30
    %v1731 = vsel %vm1087, %v1708, -1e+30
    %v1732 = vsel %vm1088, %v1711, -1e+30
    %v1733 = vsel %vm1089, %v1713, -1e+30
    %v1734 = vsel %vm1090, %v1716, -1e+30
    %v1735 = vsel %vm1091, %v1718, -1e+30
    %1736 = vmax.xlane.f32.xlu0 %v1720
    %v1737 = vpop.xlane.xlu0 %1736
    %1738 = vmax.xlane.f32.xlu0 %v1721
    %v1739 = vpop.xlane.xlu0 %1738
    %1740 = vmax.xlane.f32.xlu0 %v1722
    %v1741 = vpop.xlane.xlu0 %1740
    %1742 = vmax.xlane.f32.xlu0 %v1723
    %v1743 = vpop.xlane.xlu0 %1742
    %1744 = vmax.xlane.f32.xlu0 %v1724
    %v1745 = vpop.xlane.xlu0 %1744
    %1746 = vmax.xlane.f32.xlu0 %v1725
    %v1747 = vpop.xlane.xlu0 %1746
    %1748 = vmax.xlane.f32.xlu0 %v1726
    %v1749 = vpop.xlane.xlu0 %1748
    %1750 = vmax.xlane.f32.xlu0 %v1727
    %v1751 = vpop.xlane.xlu0 %1750
    %1752 = vmax.xlane.f32.xlu0 %v1728
    %v1753 = vpop.xlane.xlu0 %1752
    %1754 = vmax.xlane.f32.xlu0 %v1729
    %v1755 = vpop.xlane.xlu0 %1754
    %1756 = vmax.xlane.f32.xlu0 %v1730
    %v1757 = vpop.xlane.xlu0 %1756
    %1758 = vmax.xlane.f32.xlu0 %v1731
    %v1759 = vpop.xlane.xlu0 %1758
    %1760 = vmax.xlane.f32.xlu0 %v1732
    %v1761 = vpop.xlane.xlu0 %1760
    %1762 = vmax.xlane.f32.xlu0 %v1733
    %v1763 = vpop.xlane.xlu0 %1762
    %1764 = vmax.xlane.f32.xlu0 %v1734
    %v1765 = vpop.xlane.xlu0 %1764
    %1766 = vmax.xlane.f32.xlu0 %v1735
    %v1767 = vpop.xlane.xlu0 %1766
    %v1768 = vsub.f32 %v1720, %v1737
    %v1769 = vsub.f32 %v1721, %v1739
    %v1770 = vsub.f32 %v1722, %v1741
    %v1771 = vsub.f32 %v1723, %v1743
    %v1772 = vsub.f32 %v1724, %v1745
    %v1773 = vsub.f32 %v1725, %v1747
    %v1774 = vsub.f32 %v1726, %v1749
    %v1775 = vsub.f32 %v1727, %v1751
    %v1776 = vsub.f32 %v1728, %v1753
    %v1777 = vsub.f32 %v1729, %v1755
    %v1778 = vsub.f32 %v1730, %v1757
    %v1779 = vsub.f32 %v1731, %v1759
    %v1780 = vsub.f32 %v1732, %v1761
    %v1781 = vsub.f32 %v1733, %v1763
    %v1782 = vsub.f32 %v1734, %v1765
    %v1783 = vsub.f32 %v1735, %v1767
    %v1784 = vpack.c.bf16 %v1769, %v1768
    %v1785 = vpack.c.bf16 %v1771, %v1770
    %v1786 = vpack.c.bf16 %v1773, %v1772
    %v1787 = vpack.c.bf16 %v1775, %v1774
    %v1788 = vpack.c.bf16 %v1777, %v1776
    %v1789 = vpack.c.bf16 %v1779, %v1778
    %v1790 = vpack.c.bf16 %v1781, %v1780
    %v1791 = vpack.c.bf16 %v1783, %v1782
    %v1792 = vunpack.c.l.bf16 %v1784
    %v1793 = vunpack.c.h.bf16 %v1784
    %v1794 = vunpack.c.l.bf16 %v1785
    %v1795 = vunpack.c.h.bf16 %v1785
    %v1796 = vunpack.c.l.bf16 %v1786
    %v1797 = vunpack.c.h.bf16 %v1786
    %v1798 = vunpack.c.l.bf16 %v1787
    %v1799 = vunpack.c.h.bf16 %v1787
    %v1800 = vunpack.c.l.bf16 %v1788
    %v1801 = vunpack.c.h.bf16 %v1788
    %v1802 = vunpack.c.l.bf16 %v1789
    %v1803 = vunpack.c.h.bf16 %v1789
    %v1804 = vunpack.c.l.bf16 %v1790
    %v1805 = vunpack.c.h.bf16 %v1790
    %v1806 = vunpack.c.l.bf16 %v1791
    %v1807 = vunpack.c.h.bf16 %v1791
    %v1808 = vmul.f32 %v1792, 1.442695
    %v1809 = vpow.pop %v1808
    %v1810 = vmul.f32 %v1793, 1.442695
    %v1811 = vpow.pop %v1810
    %v1812 = vmul.f32 %v1794, 1.442695
    %v1813 = vpow.pop %v1812
    %v1814 = vmul.f32 %v1795, 1.442695
    %v1815 = vpow.pop %v1814
    %v1816 = vmul.f32 %v1796, 1.442695
    %v1817 = vpow.pop %v1816
    %v1818 = vmul.f32 %v1797, 1.442695
    %v1819 = vpow.pop %v1818
    %v1820 = vmul.f32 %v1798, 1.442695
    %v1821 = vpow.pop %v1820
    %v1822 = vmul.f32 %v1799, 1.442695
    %v1823 = vpow.pop %v1822
    %v1824 = vmul.f32 %v1800, 1.442695
    %v1825 = vpow.pop %v1824
    %v1826 = vmul.f32 %v1801, 1.442695
    %v1827 = vpow.pop %v1826
    %v1828 = vmul.f32 %v1802, 1.442695
    %v1829 = vpow.pop %v1828
    %v1830 = vmul.f32 %v1803, 1.442695
    %v1831 = vpow.pop %v1830
    %v1832 = vmul.f32 %v1804, 1.442695
    %v1833 = vpow.pop %v1832
    %v1834 = vmul.f32 %v1805, 1.442695
    %v1835 = vpow.pop %v1834
    %v1836 = vmul.f32 %v1806, 1.442695
    %v1837 = vpow.pop %v1836
    %v1838 = vmul.f32 %v1807, 1.442695
    %v1839 = vpow.pop %v1838
    %v1840 = vpack.c.bf16 %v1811, %v1809
    %v1841 = vpack.c.bf16 %v1815, %v1813
    %v1842 = vpack.c.bf16 %v1819, %v1817
    %v1843 = vpack.c.bf16 %v1823, %v1821
    %v1844 = vpack.c.bf16 %v1827, %v1825
    %v1845 = vpack.c.bf16 %v1831, %v1829
    %v1846 = vpack.c.bf16 %v1835, %v1833
    %v1847 = vpack.c.bf16 %v1839, %v1837
    %v1848 = vunpack.c.l.bf16 %v1840
    %v1849 = vunpack.c.h.bf16 %v1840
    %v1850 = vunpack.c.l.bf16 %v1841
    %v1851 = vunpack.c.h.bf16 %v1841
    %v1852 = vunpack.c.l.bf16 %v1842
    %v1853 = vunpack.c.h.bf16 %v1842
    %v1854 = vunpack.c.l.bf16 %v1843
    %v1855 = vunpack.c.h.bf16 %v1843
    %v1856 = vunpack.c.l.bf16 %v1844
    %v1857 = vunpack.c.h.bf16 %v1844
    %v1858 = vunpack.c.l.bf16 %v1845
    %v1859 = vunpack.c.h.bf16 %v1845
    %v1860 = vunpack.c.l.bf16 %v1846
    %v1861 = vunpack.c.h.bf16 %v1846
    %v1862 = vunpack.c.l.bf16 %v1847
    %v1863 = vunpack.c.h.bf16 %v1847
    %1864 = vadd.xlane.f32.xlu0 %v1848
    %v1865 = vpop.xlane.xlu0 %1864
    %1866 = vadd.xlane.f32.xlu0 %v1849
    %v1867 = vpop.xlane.xlu0 %1866
    %1868 = vadd.xlane.f32.xlu0 %v1850
    %v1869 = vpop.xlane.xlu0 %1868
    %1870 = vadd.xlane.f32.xlu0 %v1851
    %v1871 = vpop.xlane.xlu0 %1870
    %1872 = vadd.xlane.f32.xlu0 %v1852
    %v1873 = vpop.xlane.xlu0 %1872
    %1874 = vadd.xlane.f32.xlu0 %v1853
    %v1875 = vpop.xlane.xlu0 %1874
    %1876 = vadd.xlane.f32.xlu0 %v1854
    %v1877 = vpop.xlane.xlu0 %1876
    %1878 = vadd.xlane.f32.xlu0 %v1855
    %v1879 = vpop.xlane.xlu0 %1878
    %1880 = vadd.xlane.f32.xlu0 %v1856
    %v1881 = vpop.xlane.xlu0 %1880
    %1882 = vadd.xlane.f32.xlu0 %v1857
    %v1883 = vpop.xlane.xlu0 %1882
    %1884 = vadd.xlane.f32.xlu0 %v1858
    %v1885 = vpop.xlane.xlu0 %1884
    %1886 = vadd.xlane.f32.xlu0 %v1859
    %v1887 = vpop.xlane.xlu0 %1886
    %1888 = vadd.xlane.f32.xlu0 %v1860
    %v1889 = vpop.xlane.xlu0 %1888
    %1890 = vadd.xlane.f32.xlu0 %v1861
    %v1891 = vpop.xlane.xlu0 %1890
    %1892 = vadd.xlane.f32.xlu0 %v1862
    %v1893 = vpop.xlane.xlu0 %1892
    %1894 = vadd.xlane.f32.xlu0 %v1863
    %v1895 = vpop.xlane.xlu0 %1894
    %v1912 = vunpack.c.l.b16 %v1041
    %v1913 = vunpack.c.l.b16 %v1042
    %v1914 = vunpack.c.l.b16 %v1043
    %v1915 = vunpack.c.l.b16 %v1044
    %v1916 = vunpack.c.l.b16 %v1045
    %v1917 = vunpack.c.l.b16 %v1046
    %v1918 = vunpack.c.l.b16 %v1047
    %v1919 = vunpack.c.l.b16 %v1048
    %v1920 = vunpack.c.l.b16 %v1049
    %v1921 = vunpack.c.l.b16 %v1050
    %v1922 = vunpack.c.l.b16 %v1051
    %v1923 = vunpack.c.l.b16 %v1052
    %v1924 = vunpack.c.l.b16 %v1053
    %v1925 = vunpack.c.l.b16 %v1054
    %v1926 = vunpack.c.l.b16 %v1055
    %v1927 = vunpack.c.l.b16 %v1056
    %v1928 = vpack.c.b16 %v1913, %v1912
    %v1929 = vpack.c.b16 %v1915, %v1914
    %v1930 = vpack.c.b16 %v1917, %v1916
    %v1931 = vpack.c.b16 %v1919, %v1918
    %v1932 = vpack.c.b16 %v1921, %v1920
    %v1933 = vpack.c.b16 %v1923, %v1922
    %v1934 = vpack.c.b16 %v1925, %v1924
    %v1935 = vpack.c.b16 %v1927, %v1926
    %1944 = vmatpush.bf16.msra.mxu0 %v1935
    %1945 = vmatpush.bf16.msra.mxu0 %v1934
    %1946 = vmatpush.bf16.msra.mxu0 %v1933
    %1947 = vmatpush.bf16.msra.mxu0 %v1932
    %1948 = vmatpush.bf16.msra.mxu0 %v1931
    %1949 = vmatpush.bf16.msra.mxu0 %v1930
    %1950 = vmatpush.bf16.msra.mxu0 %v1929
    %1951 = vmatpush.bf16.msra.mxu0 %v1928
    %1952 = vmatmul.bf16.gmra.mxu0 %v1840
    %v1953 = vpop.f32.mrf.mxu0
    %v1954 = vadd.f32 0.0, %v1953
    %v1955 = vpop.f32.mrf.mxu0
    %v1956 = vadd.f32 0.0, %v1955
    %1957 = vmatmul.bf16.gmra.mxu0 %v1841
    %v1958 = vpop.f32.mrf.mxu0
    %v1959 = vadd.f32 0.0, %v1958
    %v1960 = vpop.f32.mrf.mxu0
    %v1961 = vadd.f32 0.0, %v1960
    %1962 = vmatmul.bf16.gmra.mxu0 %v1842
    %v1963 = vpop.f32.mrf.mxu0
    %v1964 = vadd.f32 0.0, %v1963
    %v1965 = vpop.f32.mrf.mxu0
    %v1966 = vadd.f32 0.0, %v1965
    %1967 = vmatmul.bf16.gmra.mxu0 %v1843
    %v1968 = vpop.f32.mrf.mxu0
    %v1969 = vadd.f32 0.0, %v1968
    %v1970 = vpop.f32.mrf.mxu0
    %v1971 = vadd.f32 0.0, %v1970
    %1972 = vmatmul.bf16.gmra.mxu0 %v1844
    %v1973 = vpop.f32.mrf.mxu0
    %v1974 = vadd.f32 0.0, %v1973
    %v1975 = vpop.f32.mrf.mxu0
    %v1976 = vadd.f32 0.0, %v1975
    %1977 = vmatmul.bf16.gmra.mxu0 %v1845
    %v1978 = vpop.f32.mrf.mxu0
    %v1979 = vadd.f32 0.0, %v1978
    %v1980 = vpop.f32.mrf.mxu0
    %v1981 = vadd.f32 0.0, %v1980
    %1982 = vmatmul.bf16.gmra.mxu0 %v1846
    %v1983 = vpop.f32.mrf.mxu0
    %v1984 = vadd.f32 0.0, %v1983
    %v1985 = vpop.f32.mrf.mxu0
    %v1986 = vadd.f32 0.0, %v1985
    %1987 = vmatmul.bf16.gmra.mxu0 %v1847
    %v1988 = vpop.f32.mrf.mxu0
    %v1989 = vadd.f32 0.0, %v1988
    %v1990 = vpop.f32.mrf.mxu0
    %v1991 = vadd.f32 0.0, %v1990
    %1992 = vdwg.mxu0
    %v1993 = vrcp.pop %v1865
    %v1994 = vrcp.pop %v1867
    %v1995 = vrcp.pop %v1869
    %v1996 = vrcp.pop %v1871
    %v1997 = vrcp.pop %v1873
    %v1998 = vrcp.pop %v1875
    %v1999 = vrcp.pop %v1877
    %v2000 = vrcp.pop %v1879
    %v2001 = vrcp.pop %v1881
    %v2002 = vrcp.pop %v1883
    %v2003 = vrcp.pop %v1885
    %v2004 = vrcp.pop %v1887
    %v2005 = vrcp.pop %v1889
    %v2006 = vrcp.pop %v1891
    %v2007 = vrcp.pop %v1893
    %v2008 = vrcp.pop %v1895
    %v2009 = vmul.f32 %v1954, %v1993
    %v2010 = vmul.f32 %v1956, %v1994
    %v2011 = vmul.f32 %v1959, %v1995
    %v2012 = vmul.f32 %v1961, %v1996
    %v2013 = vmul.f32 %v1964, %v1997
    %v2014 = vmul.f32 %v1966, %v1998
    %v2015 = vmul.f32 %v1969, %v1999
    %v2016 = vmul.f32 %v1971, %v2000
    %v2017 = vmul.f32 %v1974, %v2001
    %v2018 = vmul.f32 %v1976, %v2002
    %v2019 = vmul.f32 %v1979, %v2003
    %v2020 = vmul.f32 %v1981, %v2004
    %v2021 = vmul.f32 %v1984, %v2005
    %v2022 = vmul.f32 %v1986, %v2006
    %v2023 = vmul.f32 %v1989, %v2007
    %v2024 = vmul.f32 %v1991, %v2008
    %2025 = vst.msk [vmem:[%s2 + $0x80] sm:$0xff] %vm1148, %v2009
    %2026 = vst.msk [vmem:[%s2 + $0x88] sm:$0xff] %vm1148, %v2010
    %2027 = vst.msk [vmem:[%s2 + $0x90] sm:$0xff] %vm1148, %v2011
    %2028 = vst.msk [vmem:[%s2 + $0x98] sm:$0xff] %vm1148, %v2012
    %2029 = vst.msk [vmem:[%s2 + $0xa0] sm:$0xff] %vm1148, %v2013
    %2030 = vst.msk [vmem:[%s2 + $0xa8] sm:$0xff] %vm1148, %v2014
    %2031 = vst.msk [vmem:[%s2 + $0xb0] sm:$0xff] %vm1148, %v2015
    %2032 = vst.msk [vmem:[%s2 + $0xb8] sm:$0xff] %vm1148, %v2016
    %2033 = vst.msk [vmem:[%s2 + $0xc0] sm:$0xff] %vm1148, %v2017
    %2034 = vst.msk [vmem:[%s2 + $0xc8] sm:$0xff] %vm1148, %v2018
    %2035 = vst.msk [vmem:[%s2 + $0xd0] sm:$0xff] %vm1148, %v2019
    %2036 = vst.msk [vmem:[%s2 + $0xd8] sm:$0xff] %vm1148, %v2020
    %2037 = vst.msk [vmem:[%s2 + $0xe0] sm:$0xff] %vm1148, %v2021
    %2038 = vst.msk [vmem:[%s2 + $0xe8] sm:$0xff] %vm1148, %v2022
    %2039 = vst.msk [vmem:[%s2 + $0xf0] sm:$0xff] %vm1148, %v2023
    %2040 = vst.msk [vmem:[%s2 + $0xf8] sm:$0xff] %vm1148, %v2024
    // Predicated region
    $region14: #{head_forward.1} parent=1 // pred_check
      _
    $region15: #{head_forward.1} parent=1 // pred_check_branch
      %2042 = sbr.rel (0) target = $region17
    $region16: #{head_forward.1} parent=1 // pred_region
      _
    $region17: #{head_forward.1} parent=1 // pred_fallthru
      _
    // Predicated region
    $region18: #{head_forward.1} parent=1 // pred_check
      _
    $region19: #{head_forward.1} parent=1 // pred_check_branch
      %2044 = sbr.rel (0) target = $region21
    $region20: #{head_forward.1} parent=1 // pred_region
      _
    $region21: #{head_forward.1} parent=1 // pred_fallthru
      _
    %2045 = vsyncpa [#allocation3], 1

</llo_original>
